<compile_context>
chip_gen: v5e
topology: v5e:2x2
jax: 0.10.0
libtpu: 0.0.40
codegen_flags: <defaults>
</compile_context>

<pallas_src>
import functools

import numpy as np
import jax
import jax.numpy as jnp
from jax.experimental import pallas as pl
from jax.experimental.pallas import tpu as pltpu


# ----------------------------------------------------------------------------
# Host-side constant builders (computed once at init; passed as kernel inputs)
# ----------------------------------------------------------------------------
def _conv_tap_masks(h, w):
    """(9, h*w) f32: m[t, p] = 1 iff the 'same'-conv source pixel of tap
    t = dy*3+dx for flat pixel p = y*w+x lies inside the (h, w) image."""
    m = np.zeros((9, h * w), np.float32)
    for dy in range(3):
        for dx in range(3):
            t = dy * 3 + dx
            for y in range(h):
                for x in range(w):
                    yy, xx = y + dy - 1, x + dx - 1
                    if 0 <= yy < h and 0 <= xx < w:
                        m[t, y * w + x] = 1.0
    return m


def _avgpool2_matrix(h, w):
    """(h*w, (h//2)*(w//2)): right-multiply == AvgPool2d(2, 2) on one image."""
    ho, wo = h // 2, w // 2
    p = np.zeros((h * w, ho * wo), np.float32)
    for y in range(ho):
        for x in range(wo):
            for dy in range(2):
                for dx in range(2):
                    p[(2 * y + dy) * w + (2 * x + dx), y * wo + x] = 0.25
    return p


def _upsample2_matrix(h, w):
    """(h*w, 2h*2w): right-multiply == nearest-neighbor x2 upsample on one image."""
    ho, wo = 2 * h, 2 * w
    u = np.zeros((h * w, ho * wo), np.float32)
    for y in range(ho):
        for x in range(wo):
            u[(y // 2) * w + (x // 2), y * wo + x] = 1.0
    return u


def _flatten_ops(c, s):
    """Constant operators expressing PyTorch view(-1, C*S) without reshapes:
       T (s, c*s): lane-placement (copies spatial lane s into every channel block),
       D (c, c*s): block-diagonal channel selector."""
    T = np.zeros((s, c * s), np.float32)
    D = np.zeros((c, c * s), np.float32)
    for cc in range(c):
        for ss in range(s):
            T[ss, cc * s + ss] = 1.0
            D[cc, cc * s + ss] = 1.0
    return T, D


def _conv_weight_to_slab(w, c_in_pad=None):
    """(C_out, C_in, 3, 3) -> (C_out, 9*C_in[_pad]); columns grouped by tap t=dy*3+dx."""
    c_out, c_in = w.shape[:2]
    if c_in_pad is not None and c_in_pad > c_in:
        w = np.concatenate([w, np.zeros((c_out, c_in_pad - c_in, 3, 3), w.dtype)], axis=1)
    return np.transpose(w, (0, 2, 3, 1)).reshape(c_out, -1)


def _convtranspose_weight_to_slab(w, c_in_pad=None):
    """PyTorch ConvTranspose2d weight (C_in, C_out, 3, 3) with stride=1, padding=1
    == 'same' conv with spatially flipped kernel and swapped channels."""
    w_eq = np.transpose(w[:, :, ::-1, ::-1], (1, 0, 2, 3))
    return _conv_weight_to_slab(w_eq, c_in_pad)


# ----------------------------------------------------------------------------
# Fused Pallas kernel: full forward for ONE sample per grid step (VMEM-resident)
# ----------------------------------------------------------------------------
def _autoencoder_kernel(
    x_ref, noise_ref,
    c1w_ref, c1b_ref, m16_ref, p1_ref,
    c2w_ref, c2b_ref, m8_ref, p2_ref,
    tflat_ref, dsel_ref, tunflat_ref,
    fe1w_ref, fe1b_ref, fe2w_ref, fe2b_ref,
    fd1w_ref, fd1b_ref, fd2w_ref, fd2b_ref,
    u1_ref, t1w_ref, t1b_ref,
    u2_ref, t2w_ref, t2b_ref,
    y_ref, z_ref,
    *, height, width, noise_scale,
):
    f32 = jnp.float32
    bf16 = jnp.bfloat16

    def conv3x3(x, w_ref, b_ref, m_ref, img_w, act):
        """'same' 3x3 conv in (C, H*W) layout as ONE stacked-tap MXU matmul:
        slab (9*C_in, L) built from 8 rolled+masked copies + the center tap."""
        L = x.shape[1]
        masks = m_ref[...]                               # (9, L) f32
        pieces = []
        for dy in range(3):
            for dx in range(3):
                t = dy * 3 + dx
                off = (dy - 1) * img_w + (dx - 1)
                xs = x if off == 0 else pltpu.roll(x, (-off) % L, axis=1)
                if t != 4:                               # center tap: mask is all-ones
                    xs = xs * masks[t:t + 1, :]
                pieces.append(xs)
        slab = jnp.concatenate(pieces, axis=0).astype(bf16)        # (9*C_in, L)
        out = jnp.dot(w_ref[...], slab, preferred_element_type=f32) + b_ref[...]
        return jnp.maximum(out, 0.0) if act else out

    def resample(x, m_ref):
        # AvgPool2d / nearest x2 upsample folded into a constant bf16 right-matmul.
        return jnp.dot(x.astype(bf16), m_ref[...], preferred_element_type=f32)

    def fc(x, w_ref, b_ref):
        return jnp.maximum(jnp.dot(x, w_ref[...], preferred_element_type=f32)
                           + b_ref[...], 0.0)

    # ---- input encoder ('noisy'): x_ = x + 0.1 * noise ----
    x = x_ref[...] + noise_scale * noise_ref[...]                   # (8, H*W) f32 (ch padded)

    # ---- conv encoder ----
    h = conv3x3(x, c1w_ref, c1b_ref, m16_ref, width, act=True)      # (8,  H*W)
    h = resample(h, p1_ref)                                         # (8,  H*W/4)
    h = conv3x3(h, c2w_ref, c2b_ref, m8_ref, width // 2, act=True)  # (16, H*W/4)
    h = resample(h, p2_ref)                                         # (16, H*W/16)

    # ---- flatten == PyTorch view(-1, C*H*W): lane-place + channel-select + sublane sum ----
    dsel = dsel_ref[...]                                            # (16, 256) 0/1
    flat = jnp.sum(jnp.dot(h, tflat_ref[...], preferred_element_type=f32) * dsel,
                   axis=0, keepdims=True)                           # (1, 256)

    # ---- fc encoder (f32; produces the latent) ----
    z1 = fc(flat, fe1w_ref, fe1b_ref)                               # (1, 64)
    z = fc(z1, fe2w_ref, fe2b_ref)                                  # (1, 32)
    z_ref[0] = z

    # ---- fc decoder ----
    d1 = fc(z, fd1w_ref, fd1b_ref)                                  # (1, 64)
    d2 = fc(d1, fd2w_ref, fd2b_ref)                                 # (1, 256)

    # ---- unflatten back to (C, S) conv layout (inverse of the flatten operators) ----
    d = jnp.dot(d2 * dsel, tunflat_ref[...], preferred_element_type=f32)     # (16, 16)

    # ---- conv decoder: upsample -> convT(+relu) -> upsample -> convT ----
    d = resample(d, u1_ref)                                         # (16, H*W/4)
    d = conv3x3(d, t1w_ref, t1b_ref, m8_ref, width // 2, act=True)  # (8,  H*W/4)
    d = resample(d, u2_ref)                                         # (8,  H*W)
    logits = conv3x3(d, t2w_ref, t2b_ref, m16_ref, width, act=False)  # (4, H*W)

    # ---- log-softmax over the channel (sublane) axis == PyTorch dim=1 ----
    mx = jnp.max(logits, axis=0, keepdims=True)
    lse = mx + jnp.log(jnp.sum(jnp.exp(logits - mx), axis=0, keepdims=True))
    y_ref[...] = logits - lse


# ----------------------------------------------------------------------------
# Parameters: kernel-ready (pre-transposed / pre-flipped / slab-stacked / bf16)
# ----------------------------------------------------------------------------
def init_params(key, height=16, width=16, input_channels=4,
                conv_channels=(8, 16), hidden_sizes=(64, 32)):
    c1, c2 = conv_channels
    s2 = (height // 4) * (width // 4)
    to_linear = c2 * s2

    def dense(k, shape, fan_in):
        return np.asarray(jax.random.normal(k, shape, jnp.float32)) / float(np.sqrt(fan_in))

    ks = jax.random.split(key, 8)
    conv1_w = dense(ks[0], (c1, input_channels, 3, 3), input_channels * 9)
    conv2_w = dense(ks[1], (c2, c1, 3, 3), c1 * 9)
    fce1_w = dense(ks[2], (hidden_sizes[0], to_linear), to_linear)
    fce2_w = dense(ks[3], (hidden_sizes[1], hidden_sizes[0]), hidden_sizes[0])
    fcd1_w = dense(ks[4], (hidden_sizes[0], hidden_sizes[1]), hidden_sizes[1])
    fcd2_w = dense(ks[5], (to_linear, hidden_sizes[0]), hidden_sizes[0])
    convt1_w = dense(ks[6], (c2, c1, 3, 3), c2 * 9)   # ConvTranspose2d layout (C_in, C_out, kh, kw)
    convt2_w = dense(ks[7], (c1, input_channels, 3, 3), c1 * 9)

    bf, f32 = jnp.bfloat16, jnp.float32
    T, D = _flatten_ops(c2, s2)
    cin_pad = max(8, input_channels)   # sublane-align the first conv's input channels

    return {
        # conv weight slabs (C_out, 9*C_in) bf16, biases (C_out, 1) f32
        "c1w": jnp.asarray(_conv_weight_to_slab(conv1_w, cin_pad), bf),
        "c1b": jnp.zeros((c1, 1), f32),
        "c2w": jnp.asarray(_conv_weight_to_slab(conv2_w), bf),
        "c2b": jnp.zeros((c2, 1), f32),
        "t1w": jnp.asarray(_convtranspose_weight_to_slab(convt1_w), bf),
        "t1b": jnp.zeros((c1, 1), f32),
        "t2w": jnp.asarray(_convtranspose_weight_to_slab(convt2_w), bf),
        "t2b": jnp.zeros((input_channels, 1), f32),
        # fc encoder / decoder: pre-transposed to (K, N) f32, biases (1, N)
        "fe1w": jnp.asarray(fce1_w.T, f32), "fe1b": jnp.zeros((1, hidden_sizes[0]), f32),
        "fe2w": jnp.asarray(fce2_w.T, f32), "fe2b": jnp.zeros((1, hidden_sizes[1]), f32),
        "fd1w": jnp.asarray(fcd1_w.T, f32), "fd1b": jnp.zeros((1, hidden_sizes[0]), f32),
        "fd2w": jnp.asarray(fcd2_w.T, f32), "fd2b": jnp.zeros((1, to_linear), f32),
        # structural constants (per-sample sized; pool/upsample exactly bf16-representable)
        "m16": jnp.asarray(_conv_tap_masks(height, width), f32),
        "m8": jnp.asarray(_conv_tap_masks(height // 2, width // 2), f32),
        "p1": jnp.asarray(_avgpool2_matrix(height, width), bf),
        "p2": jnp.asarray(_avgpool2_matrix(height // 2, width // 2), bf),
        "u1": jnp.asarray(_upsample2_matrix(height // 4, width // 4), bf),
        "u2": jnp.asarray(_upsample2_matrix(height // 2, width // 2), bf),
        "tflat": jnp.asarray(T, f32), "dsel": jnp.asarray(D, f32),
        "tunflat": jnp.asarray(T.T, f32),
    }


# ----------------------------------------------------------------------------
# Forward pass (mirrors CNNAutoencoderModel.forward) — one pallas_call
# ----------------------------------------------------------------------------
def cnn_autoencoder_forward(params, x, noise, noise_scale=0.1):
    b, c_in, height, width = x.shape
    hw = height * width
    latent_dim = params["fe2w"].shape[1]
    cin_pad = params["c1w"].shape[1] // 9

    # single host-side relayout to the kernel's (C, B*H*W) layout + zero channel pad
    def to_kernel_layout(t):
        tf = t.transpose(1, 0, 2, 3).reshape(c_in, b * hw)
        if cin_pad > c_in:
            tf = jnp.concatenate([tf, jnp.zeros((cin_pad - c_in, b * hw), tf.dtype)], axis=0)
        return tf

    x_flat = to_kernel_layout(x)
    n_flat = to_kernel_layout(noise)
    # TODO(synk): noise could be generated in-kernel via pltpu.prng_seed/prng_random_bits;
    # kept as an explicit input for deterministic host-provided noise.

    kernel = functools.partial(_autoencoder_kernel, height=height, width=width,
                               noise_scale=noise_scale)

    def const_spec(a):
        zeros = (0,) * a.ndim
        return pl.BlockSpec(a.shape, lambda i: zeros)

    const_names = ["c1w", "c1b", "m16", "p1", "c2w", "c2b", "m8", "p2",
                   "tflat", "dsel", "tunflat",
                   "fe1w", "fe1b", "fe2w", "fe2b",
                   "fd1w", "fd1b", "fd2w", "fd2b",
                   "u1", "t1w", "t1b", "u2", "t2w", "t2b"]
    consts = [params[n] for n in const_names]

    y_flat, z3 = pl.pallas_call(
        kernel,
        grid=(b,),                                 # one sample per step; both TCs on v7x
        in_specs=[pl.BlockSpec((cin_pad, hw), lambda i: (0, i)),
                  pl.BlockSpec((cin_pad, hw), lambda i: (0, i))]
                 + [const_spec(a) for a in consts],
        out_specs=[pl.BlockSpec((c_in, hw), lambda i: (0, i)),
                   pl.BlockSpec((1, 1, latent_dim), lambda i: (i, 0, 0))],
        out_shape=(jax.ShapeDtypeStruct((c_in, b * hw), jnp.float32),
                   jax.ShapeDtypeStruct((b, 1, latent_dim), jnp.float32)),
        compiler_params=pltpu.CompilerParams(dimension_semantics=("parallel",)),
    )(x_flat, n_flat, *consts)

    y = y_flat.reshape(c_in, b, height, width).transpose(1, 0, 2, 3)   # back to NCHW
    z = z3[:, 0, :]
    # TODO(synk): input_encoder.input_history / .reset() are stateful host-side
    # bookkeeping with no kernel equivalent; only the tensors are returned.
    # TODO(synk): exact 'avg' unpooling op from u.get_convtranspose2d_layers is
    # unknown; nearest-neighbor 2x upsample (nn.Upsample) is assumed.
    return dict(input=x, output=y, latent=z)


if __name__ == "__main__":
    key = jax.random.PRNGKey(0)
    k_x, k_noise, k_params = jax.random.split(key, 3)

    B, C, H, W = 2, 4, 16, 16
    x = jax.random.normal(k_x, (B, C, H, W), jnp.float32)
    noise = jax.random.normal(k_noise, (B, C, H, W), jnp.float32)
    params = init_params(k_params, height=H, width=W, input_channels=C)

    fwd = jax.jit(cnn_autoencoder_forward)
    out = fwd(params, x, noise)
    jax.block_until_ready(out)

    assert out["output"].shape == (B, C, H, W)
    assert out["latent"].shape == (B, 32)
    # log-softmax sanity: exp over channel dim sums to ~1
    s = jnp.exp(out["output"]).sum(axis=1)
    assert bool(jnp.allclose(s, 1.0, atol=1e-3))

    print("KERNEL_OK")
</pallas_src>

<mosaic_0001>
module attributes {stable_mosaic.version = 11 : i64} {
  func.func @_autoencoder_kernel(%arg0: i32, %arg1: memref<8x256xf32, #tpu.memory_space<vmem>>, %arg2: memref<8x256xf32, #tpu.memory_space<vmem>>, %arg3: memref<8x72xbf16, #tpu.memory_space<vmem>>, %arg4: memref<8x1xf32, #tpu.memory_space<vmem>>, %arg5: memref<9x256xf32, #tpu.memory_space<vmem>>, %arg6: memref<256x64xbf16, #tpu.memory_space<vmem>>, %arg7: memref<16x72xbf16, #tpu.memory_space<vmem>>, %arg8: memref<16x1xf32, #tpu.memory_space<vmem>>, %arg9: memref<9x64xf32, #tpu.memory_space<vmem>>, %arg10: memref<64x16xbf16, #tpu.memory_space<vmem>>, %arg11: memref<16x256xf32, #tpu.memory_space<vmem>>, %arg12: memref<16x256xf32, #tpu.memory_space<vmem>>, %arg13: memref<256x16xf32, #tpu.memory_space<vmem>>, %arg14: memref<256x64xf32, #tpu.memory_space<vmem>>, %arg15: memref<1x64xf32, #tpu.memory_space<vmem>>, %arg16: memref<64x32xf32, #tpu.memory_space<vmem>>, %arg17: memref<1x32xf32, #tpu.memory_space<vmem>>, %arg18: memref<32x64xf32, #tpu.memory_space<vmem>>, %arg19: memref<1x64xf32, #tpu.memory_space<vmem>>, %arg20: memref<64x256xf32, #tpu.memory_space<vmem>>, %arg21: memref<1x256xf32, #tpu.memory_space<vmem>>, %arg22: memref<16x64xbf16, #tpu.memory_space<vmem>>, %arg23: memref<8x144xbf16, #tpu.memory_space<vmem>>, %arg24: memref<8x1xf32, #tpu.memory_space<vmem>>, %arg25: memref<64x256xbf16, #tpu.memory_space<vmem>>, %arg26: memref<4x72xbf16, #tpu.memory_space<vmem>>, %arg27: memref<4x1xf32, #tpu.memory_space<vmem>>, %arg28: memref<4x256xf32, #tpu.memory_space<vmem>>, %arg29: memref<1x1x32xf32, #tpu.memory_space<vmem>>) attributes {dimension_semantics = [#tpu.dimension_semantics<parallel>], iteration_bounds = array<i64: 2>, scalar_prefetch = 0 : i64, scratch_operands = 0 : i64, tpu.core_type = #tpu.core_type<tc>, window_params = [{transform_indices = @transform_0, window_bounds = array<i64: 8, 256>}, {transform_indices = @transform_1, window_bounds = array<i64: 8, 256>}, {pipeline_mode = #tpu.pipeline_mode<synchronous>, transform_indices = @transform_2, window_bounds = array<i64: 8, 72>}, {pipeline_mode = #tpu.pipeline_mode<synchronous>, transform_indices = @transform_3, window_bounds = array<i64: 8, 1>}, {pipeline_mode = #tpu.pipeline_mode<synchronous>, transform_indices = @transform_4, window_bounds = array<i64: 9, 256>}, {pipeline_mode = #tpu.pipeline_mode<synchronous>, transform_indices = @transform_5, window_bounds = array<i64: 256, 64>}, {pipeline_mode = #tpu.pipeline_mode<synchronous>, transform_indices = @transform_6, window_bounds = array<i64: 16, 72>}, {pipeline_mode = #tpu.pipeline_mode<synchronous>, transform_indices = @transform_7, window_bounds = array<i64: 16, 1>}, {pipeline_mode = #tpu.pipeline_mode<synchronous>, transform_indices = @transform_8, window_bounds = array<i64: 9, 64>}, {pipeline_mode = #tpu.pipeline_mode<synchronous>, transform_indices = @transform_9, window_bounds = array<i64: 64, 16>}, {pipeline_mode = #tpu.pipeline_mode<synchronous>, transform_indices = @transform_10, window_bounds = array<i64: 16, 256>}, {pipeline_mode = #tpu.pipeline_mode<synchronous>, transform_indices = @transform_11, window_bounds = array<i64: 16, 256>}, {pipeline_mode = #tpu.pipeline_mode<synchronous>, transform_indices = @transform_12, window_bounds = array<i64: 256, 16>}, {pipeline_mode = #tpu.pipeline_mode<synchronous>, transform_indices = @transform_13, window_bounds = array<i64: 256, 64>}, {pipeline_mode = #tpu.pipeline_mode<synchronous>, transform_indices = @transform_14, window_bounds = array<i64: 1, 64>}, {pipeline_mode = #tpu.pipeline_mode<synchronous>, transform_indices = @transform_15, window_bounds = array<i64: 64, 32>}, {pipeline_mode = #tpu.pipeline_mode<synchronous>, transform_indices = @transform_16, window_bounds = array<i64: 1, 32>}, {pipeline_mode = #tpu.pipeline_mode<synchronous>, transform_indices = @transform_17, window_bounds = array<i64: 32, 64>}, {pipeline_mode = #tpu.pipeline_mode<synchronous>, transform_indices = @transform_18, window_bounds = array<i64: 1, 64>}, {pipeline_mode = #tpu.pipeline_mode<synchronous>, transform_indices = @transform_19, window_bounds = array<i64: 64, 256>}, {pipeline_mode = #tpu.pipeline_mode<synchronous>, transform_indices = @transform_20, window_bounds = array<i64: 1, 256>}, {pipeline_mode = #tpu.pipeline_mode<synchronous>, transform_indices = @transform_21, window_bounds = array<i64: 16, 64>}, {pipeline_mode = #tpu.pipeline_mode<synchronous>, transform_indices = @transform_22, window_bounds = array<i64: 8, 144>}, {pipeline_mode = #tpu.pipeline_mode<synchronous>, transform_indices = @transform_23, window_bounds = array<i64: 8, 1>}, {pipeline_mode = #tpu.pipeline_mode<synchronous>, transform_indices = @transform_24, window_bounds = array<i64: 64, 256>}, {pipeline_mode = #tpu.pipeline_mode<synchronous>, transform_indices = @transform_25, window_bounds = array<i64: 4, 72>}, {pipeline_mode = #tpu.pipeline_mode<synchronous>, transform_indices = @transform_26, window_bounds = array<i64: 4, 1>}, {transform_indices = @transform_27, window_bounds = array<i64: 4, 256>}, {transform_indices = @transform_28, window_bounds = array<i64: 1, 1, 32>}]} {
    %c0 = arith.constant 0 : index
    %c0_0 = arith.constant 0 : index
    %0 = vector.load %arg1[%c0, %c0_0] : memref<8x256xf32, #tpu.memory_space<vmem>>, vector<8x256xf32>
    %c0_1 = arith.constant 0 : index
    %c0_2 = arith.constant 0 : index
    %1 = vector.load %arg2[%c0_1, %c0_2] : memref<8x256xf32, #tpu.memory_space<vmem>>, vector<8x256xf32>
    %cst = arith.constant 1.000000e-01 : f32
    %2 = vector.broadcast %cst : f32 to vector<8x256xf32>
    %3 = arith.mulf %2, %1 : vector<8x256xf32>
    %4 = arith.addf %0, %3 : vector<8x256xf32>
    %c0_3 = arith.constant 0 : index
    %c0_4 = arith.constant 0 : index
    %5 = vector.load %arg5[%c0_3, %c0_4] : memref<9x256xf32, #tpu.memory_space<vmem>>, vector<9x256xf32>
    %c17_i32 = arith.constant 17 : i32
    %6 = tpu.dynamic_rotate %4 by %c17_i32 dim 1 : vector<8x256xf32>, i32 -> vector<8x256xf32>
    %7 = vector.extract_strided_slice %5 {offsets = [0, 0], sizes = [1, 256], strides = [1, 1]} : vector<9x256xf32> to vector<1x256xf32>
    %8 = vector.broadcast %7 : vector<1x256xf32> to vector<8x256xf32>
    %9 = arith.mulf %6, %8 : vector<8x256xf32>
    %c16_i32 = arith.constant 16 : i32
    %10 = tpu.dynamic_rotate %4 by %c16_i32 dim 1 : vector<8x256xf32>, i32 -> vector<8x256xf32>
    %11 = vector.extract_strided_slice %5 {offsets = [1, 0], sizes = [1, 256], strides = [1, 1]} : vector<9x256xf32> to vector<1x256xf32>
    %12 = vector.broadcast %11 : vector<1x256xf32> to vector<8x256xf32>
    %13 = arith.mulf %10, %12 : vector<8x256xf32>
    %c15_i32 = arith.constant 15 : i32
    %14 = tpu.dynamic_rotate %4 by %c15_i32 dim 1 : vector<8x256xf32>, i32 -> vector<8x256xf32>
    %15 = vector.extract_strided_slice %5 {offsets = [2, 0], sizes = [1, 256], strides = [1, 1]} : vector<9x256xf32> to vector<1x256xf32>
    %16 = vector.broadcast %15 : vector<1x256xf32> to vector<8x256xf32>
    %17 = arith.mulf %14, %16 : vector<8x256xf32>
    %c1_i32 = arith.constant 1 : i32
    %18 = tpu.dynamic_rotate %4 by %c1_i32 dim 1 : vector<8x256xf32>, i32 -> vector<8x256xf32>
    %19 = vector.extract_strided_slice %5 {offsets = [3, 0], sizes = [1, 256], strides = [1, 1]} : vector<9x256xf32> to vector<1x256xf32>
    %20 = vector.broadcast %19 : vector<1x256xf32> to vector<8x256xf32>
    %21 = arith.mulf %18, %20 : vector<8x256xf32>
    %c255_i32 = arith.constant 255 : i32
    %22 = tpu.dynamic_rotate %4 by %c255_i32 dim 1 : vector<8x256xf32>, i32 -> vector<8x256xf32>
    %23 = vector.extract_strided_slice %5 {offsets = [5, 0], sizes = [1, 256], strides = [1, 1]} : vector<9x256xf32> to vector<1x256xf32>
    %24 = vector.broadcast %23 : vector<1x256xf32> to vector<8x256xf32>
    %25 = arith.mulf %22, %24 : vector<8x256xf32>
    %c241_i32 = arith.constant 241 : i32
    %26 = tpu.dynamic_rotate %4 by %c241_i32 dim 1 : vector<8x256xf32>, i32 -> vector<8x256xf32>
    %27 = vector.extract_strided_slice %5 {offsets = [6, 0], sizes = [1, 256], strides = [1, 1]} : vector<9x256xf32> to vector<1x256xf32>
    %28 = vector.broadcast %27 : vector<1x256xf32> to vector<8x256xf32>
    %29 = arith.mulf %26, %28 : vector<8x256xf32>
    %c240_i32 = arith.constant 240 : i32
    %30 = tpu.dynamic_rotate %4 by %c240_i32 dim 1 : vector<8x256xf32>, i32 -> vector<8x256xf32>
    %31 = vector.extract_strided_slice %5 {offsets = [7, 0], sizes = [1, 256], strides = [1, 1]} : vector<9x256xf32> to vector<1x256xf32>
    %32 = vector.broadcast %31 : vector<1x256xf32> to vector<8x256xf32>
    %33 = arith.mulf %30, %32 : vector<8x256xf32>
    %c239_i32 = arith.constant 239 : i32
    %34 = tpu.dynamic_rotate %4 by %c239_i32 dim 1 : vector<8x256xf32>, i32 -> vector<8x256xf32>
    %35 = vector.extract_strided_slice %5 {offsets = [8, 0], sizes = [1, 256], strides = [1, 1]} : vector<9x256xf32> to vector<1x256xf32>
    %36 = vector.broadcast %35 : vector<1x256xf32> to vector<8x256xf32>
    %37 = arith.mulf %34, %36 : vector<8x256xf32>
    %38 = tpu.concatenate %9, %13, %17, %21, %4, %25, %29, %33, %37 in 0 : vector<8x256xf32>, vector<8x256xf32>, vector<8x256xf32>, vector<8x256xf32>, vector<8x256xf32>, vector<8x256xf32>, vector<8x256xf32>, vector<8x256xf32>, vector<8x256xf32> -> vector<72x256xf32>
    %39 = arith.truncf %38 : vector<72x256xf32> to vector<72x256xbf16>
    %c0_5 = arith.constant 0 : index
    %c0_6 = arith.constant 0 : index
    %40 = vector.load %arg3[%c0_5, %c0_6] : memref<8x72xbf16, #tpu.memory_space<vmem>>, vector<8x72xbf16>
    %cst_7 = arith.constant dense<0.000000e+00> : vector<8x256xf32>
    %41 = tpu.matmul %40, %39, %cst_7 {dimension_numbers = #tpu.dot_dimension_numbers<[1], [0], [0], [1], [0, 0, 1, 1], [], []>} : vector<8x72xbf16>, vector<72x256xbf16>, vector<8x256xf32> -> vector<8x256xf32>
    %c0_8 = arith.constant 0 : index
    %c0_9 = arith.constant 0 : index
    %42 = vector.load %arg4[%c0_8, %c0_9] : memref<8x1xf32, #tpu.memory_space<vmem>>, vector<8x1xf32>
    %43 = vector.broadcast %42 : vector<8x1xf32> to vector<8x256xf32>
    %44 = arith.addf %41, %43 : vector<8x256xf32>
    %cst_10 = arith.constant 0.000000e+00 : f32
    %45 = vector.broadcast %cst_10 : f32 to vector<8x256xf32>
    %46 = arith.maximumf %44, %45 : vector<8x256xf32>
    %47 = arith.truncf %46 : vector<8x256xf32> to vector<8x256xbf16>
    %c0_11 = arith.constant 0 : index
    %c0_12 = arith.constant 0 : index
    %48 = vector.load %arg6[%c0_11, %c0_12] : memref<256x64xbf16, #tpu.memory_space<vmem>>, vector<256x64xbf16>
    %cst_13 = arith.constant dense<0.000000e+00> : vector<8x64xf32>
    %49 = tpu.matmul %47, %48, %cst_13 {dimension_numbers = #tpu.dot_dimension_numbers<[1], [0], [0], [1], [0, 0, 1, 1], [], []>} : vector<8x256xbf16>, vector<256x64xbf16>, vector<8x64xf32> -> vector<8x64xf32>
    %c0_14 = arith.constant 0 : index
    %c0_15 = arith.constant 0 : index
    %50 = vector.load %arg9[%c0_14, %c0_15] : memref<9x64xf32, #tpu.memory_space<vmem>>, vector<9x64xf32>
    %c9_i32 = arith.constant 9 : i32
    %51 = tpu.dynamic_rotate %49 by %c9_i32 dim 1 : vector<8x64xf32>, i32 -> vector<8x64xf32>
    %52 = vector.extract_strided_slice %50 {offsets = [0, 0], sizes = [1, 64], strides = [1, 1]} : vector<9x64xf32> to vector<1x64xf32>
    %53 = vector.broadcast %52 : vector<1x64xf32> to vector<8x64xf32>
    %54 = arith.mulf %51, %53 : vector<8x64xf32>
    %c8_i32 = arith.constant 8 : i32
    %55 = tpu.dynamic_rotate %49 by %c8_i32 dim 1 : vector<8x64xf32>, i32 -> vector<8x64xf32>
    %56 = vector.extract_strided_slice %50 {offsets = [1, 0], sizes = [1, 64], strides = [1, 1]} : vector<9x64xf32> to vector<1x64xf32>
    %57 = vector.broadcast %56 : vector<1x64xf32> to vector<8x64xf32>
    %58 = arith.mulf %55, %57 : vector<8x64xf32>
    %c7_i32 = arith.constant 7 : i32
    %59 = tpu.dynamic_rotate %49 by %c7_i32 dim 1 : vector<8x64xf32>, i32 -> vector<8x64xf32>
    %60 = vector.extract_strided_slice %50 {offsets = [2, 0], sizes = [1, 64], strides = [1, 1]} : vector<9x64xf32> to vector<1x64xf32>
    %61 = vector.broadcast %60 : vector<1x64xf32> to vector<8x64xf32>
    %62 = arith.mulf %59, %61 : vector<8x64xf32>
    %c1_i32_16 = arith.constant 1 : i32
    %63 = tpu.dynamic_rotate %49 by %c1_i32_16 dim 1 : vector<8x64xf32>, i32 -> vector<8x64xf32>
    %64 = vector.extract_strided_slice %50 {offsets = [3, 0], sizes = [1, 64], strides = [1, 1]} : vector<9x64xf32> to vector<1x64xf32>
    %65 = vector.broadcast %64 : vector<1x64xf32> to vector<8x64xf32>
    %66 = arith.mulf %63, %65 : vector<8x64xf32>
    %c63_i32 = arith.constant 63 : i32
    %67 = tpu.dynamic_rotate %49 by %c63_i32 dim 1 : vector<8x64xf32>, i32 -> vector<8x64xf32>
    %68 = vector.extract_strided_slice %50 {offsets = [5, 0], sizes = [1, 64], strides = [1, 1]} : vector<9x64xf32> to vector<1x64xf32>
    %69 = vector.broadcast %68 : vector<1x64xf32> to vector<8x64xf32>
    %70 = arith.mulf %67, %69 : vector<8x64xf32>
    %c57_i32 = arith.constant 57 : i32
    %71 = tpu.dynamic_rotate %49 by %c57_i32 dim 1 : vector<8x64xf32>, i32 -> vector<8x64xf32>
    %72 = vector.extract_strided_slice %50 {offsets = [6, 0], sizes = [1, 64], strides = [1, 1]} : vector<9x64xf32> to vector<1x64xf32>
    %73 = vector.broadcast %72 : vector<1x64xf32> to vector<8x64xf32>
    %74 = arith.mulf %71, %73 : vector<8x64xf32>
    %c56_i32 = arith.constant 56 : i32
    %75 = tpu.dynamic_rotate %49 by %c56_i32 dim 1 : vector<8x64xf32>, i32 -> vector<8x64xf32>
    %76 = vector.extract_strided_slice %50 {offsets = [7, 0], sizes = [1, 64], strides = [1, 1]} : vector<9x64xf32> to vector<1x64xf32>
    %77 = vector.broadcast %76 : vector<1x64xf32> to vector<8x64xf32>
    %78 = arith.mulf %75, %77 : vector<8x64xf32>
    %c55_i32 = arith.constant 55 : i32
    %79 = tpu.dynamic_rotate %49 by %c55_i32 dim 1 : vector<8x64xf32>, i32 -> vector<8x64xf32>
    %80 = vector.extract_strided_slice %50 {offsets = [8, 0], sizes = [1, 64], strides = [1, 1]} : vector<9x64xf32> to vector<1x64xf32>
    %81 = vector.broadcast %80 : vector<1x64xf32> to vector<8x64xf32>
    %82 = arith.mulf %79, %81 : vector<8x64xf32>
    %83 = tpu.concatenate %54, %58, %62, %66, %49, %70, %74, %78, %82 in 0 : vector<8x64xf32>, vector<8x64xf32>, vector<8x64xf32>, vector<8x64xf32>, vector<8x64xf32>, vector<8x64xf32>, vector<8x64xf32>, vector<8x64xf32>, vector<8x64xf32> -> vector<72x64xf32>
    %84 = arith.truncf %83 : vector<72x64xf32> to vector<72x64xbf16>
    %c0_17 = arith.constant 0 : index
    %c0_18 = arith.constant 0 : index
    %85 = vector.load %arg7[%c0_17, %c0_18] : memref<16x72xbf16, #tpu.memory_space<vmem>>, vector<16x72xbf16>
    %cst_19 = arith.constant dense<0.000000e+00> : vector<16x64xf32>
    %86 = tpu.matmul %85, %84, %cst_19 {dimension_numbers = #tpu.dot_dimension_numbers<[1], [0], [0], [1], [0, 0, 1, 1], [], []>} : vector<16x72xbf16>, vector<72x64xbf16>, vector<16x64xf32> -> vector<16x64xf32>
    %c0_20 = arith.constant 0 : index
    %c0_21 = arith.constant 0 : index
    %87 = vector.load %arg8[%c0_20, %c0_21] : memref<16x1xf32, #tpu.memory_space<vmem>>, vector<16x1xf32>
    %88 = vector.broadcast %87 : vector<16x1xf32> to vector<16x64xf32>
    %89 = arith.addf %86, %88 : vector<16x64xf32>
    %cst_22 = arith.constant 0.000000e+00 : f32
    %90 = vector.broadcast %cst_22 : f32 to vector<16x64xf32>
    %91 = arith.maximumf %89, %90 : vector<16x64xf32>
    %92 = arith.truncf %91 : vector<16x64xf32> to vector<16x64xbf16>
    %c0_23 = arith.constant 0 : index
    %c0_24 = arith.constant 0 : index
    %93 = vector.load %arg10[%c0_23, %c0_24] : memref<64x16xbf16, #tpu.memory_space<vmem>>, vector<64x16xbf16>
    %cst_25 = arith.constant dense<0.000000e+00> : vector<16x16xf32>
    %94 = tpu.matmul %92, %93, %cst_25 {dimension_numbers = #tpu.dot_dimension_numbers<[1], [0], [0], [1], [0, 0, 1, 1], [], []>} : vector<16x64xbf16>, vector<64x16xbf16>, vector<16x16xf32> -> vector<16x16xf32>
    %c0_26 = arith.constant 0 : index
    %c0_27 = arith.constant 0 : index
    %95 = vector.load %arg12[%c0_26, %c0_27] : memref<16x256xf32, #tpu.memory_space<vmem>>, vector<16x256xf32>
    %c0_28 = arith.constant 0 : index
    %c0_29 = arith.constant 0 : index
    %96 = vector.load %arg11[%c0_28, %c0_29] : memref<16x256xf32, #tpu.memory_space<vmem>>, vector<16x256xf32>
    %cst_30 = arith.constant dense<0.000000e+00> : vector<16x256xf32>
    %97 = tpu.matmul %94, %96, %cst_30 {dimension_numbers = #tpu.dot_dimension_numbers<[1], [0], [0], [1], [0, 0, 1, 1], [], []>} : vector<16x16xf32>, vector<16x256xf32>, vector<16x256xf32> -> vector<16x256xf32>
    %98 = arith.mulf %97, %95 : vector<16x256xf32>
    %cst_31 = arith.constant dense<0.000000e+00> : vector<256xf32>
    %99 = vector.multi_reduction <add>, %98, %cst_31 [0] : vector<16x256xf32> to vector<256xf32>
    %100 = vector.shape_cast %99 : vector<256xf32> to vector<1x256xf32>
    %c0_32 = arith.constant 0 : index
    %c0_33 = arith.constant 0 : index
    %101 = vector.load %arg14[%c0_32, %c0_33] : memref<256x64xf32, #tpu.memory_space<vmem>>, vector<256x64xf32>
    %cst_34 = arith.constant dense<0.000000e+00> : vector<1x64xf32>
    %102 = tpu.matmul %100, %101, %cst_34 {dimension_numbers = #tpu.dot_dimension_numbers<[1], [0], [0], [1], [0, 0, 1, 1], [], []>} : vector<1x256xf32>, vector<256x64xf32>, vector<1x64xf32> -> vector<1x64xf32>
    %c0_35 = arith.constant 0 : index
    %c0_36 = arith.constant 0 : index
    %103 = vector.load %arg15[%c0_35, %c0_36] : memref<1x64xf32, #tpu.memory_space<vmem>>, vector<1x64xf32>
    %104 = arith.addf %102, %103 : vector<1x64xf32>
    %cst_37 = arith.constant 0.000000e+00 : f32
    %105 = vector.broadcast %cst_37 : f32 to vector<1x64xf32>
    %106 = arith.maximumf %104, %105 : vector<1x64xf32>
    %c0_38 = arith.constant 0 : index
    %c0_39 = arith.constant 0 : index
    %107 = vector.load %arg16[%c0_38, %c0_39] : memref<64x32xf32, #tpu.memory_space<vmem>>, vector<64x32xf32>
    %cst_40 = arith.constant dense<0.000000e+00> : vector<1x32xf32>
    %108 = tpu.matmul %106, %107, %cst_40 {dimension_numbers = #tpu.dot_dimension_numbers<[1], [0], [0], [1], [0, 0, 1, 1], [], []>} : vector<1x64xf32>, vector<64x32xf32>, vector<1x32xf32> -> vector<1x32xf32>
    %c0_41 = arith.constant 0 : index
    %c0_42 = arith.constant 0 : index
    %109 = vector.load %arg17[%c0_41, %c0_42] : memref<1x32xf32, #tpu.memory_space<vmem>>, vector<1x32xf32>
    %110 = arith.addf %108, %109 : vector<1x32xf32>
    %cst_43 = arith.constant 0.000000e+00 : f32
    %111 = vector.broadcast %cst_43 : f32 to vector<1x32xf32>
    %112 = arith.maximumf %110, %111 : vector<1x32xf32>
    %c0_44 = arith.constant 0 : index
    %c0_45 = arith.constant 0 : index
    %c0_46 = arith.constant 0 : index
    %113 = vector.load %arg29[%c0_44, %c0_45, %c0_46] : memref<1x1x32xf32, #tpu.memory_space<vmem>>, vector<1x1x32xf32>
    %114 = vector.shape_cast %113 : vector<1x1x32xf32> to vector<1x32xf32>
    %115 = vector.shape_cast %112 : vector<1x32xf32> to vector<1x1x32xf32>
    tpu.vector_store %arg29[%c0_44, %c0_45, %c0_46], %115 {strides = array<i32>} : memref<1x1x32xf32, #tpu.memory_space<vmem>>, vector<1x1x32xf32>,
    %c0_47 = arith.constant 0 : index
    %c0_48 = arith.constant 0 : index
    %116 = vector.load %arg18[%c0_47, %c0_48] : memref<32x64xf32, #tpu.memory_space<vmem>>, vector<32x64xf32>
    %cst_49 = arith.constant dense<0.000000e+00> : vector<1x64xf32>
    %117 = tpu.matmul %112, %116, %cst_49 {dimension_numbers = #tpu.dot_dimension_numbers<[1], [0], [0], [1], [0, 0, 1, 1], [], []>} : vector<1x32xf32>, vector<32x64xf32>, vector<1x64xf32> -> vector<1x64xf32>
    %c0_50 = arith.constant 0 : index
    %c0_51 = arith.constant 0 : index
    %118 = vector.load %arg19[%c0_50, %c0_51] : memref<1x64xf32, #tpu.memory_space<vmem>>, vector<1x64xf32>
    %119 = arith.addf %117, %118 : vector<1x64xf32>
    %cst_52 = arith.constant 0.000000e+00 : f32
    %120 = vector.broadcast %cst_52 : f32 to vector<1x64xf32>
    %121 = arith.maximumf %119, %120 : vector<1x64xf32>
    %c0_53 = arith.constant 0 : index
    %c0_54 = arith.constant 0 : index
    %122 = vector.load %arg20[%c0_53, %c0_54] : memref<64x256xf32, #tpu.memory_space<vmem>>, vector<64x256xf32>
    %cst_55 = arith.constant dense<0.000000e+00> : vector<1x256xf32>
    %123 = tpu.matmul %121, %122, %cst_55 {dimension_numbers = #tpu.dot_dimension_numbers<[1], [0], [0], [1], [0, 0, 1, 1], [], []>} : vector<1x64xf32>, vector<64x256xf32>, vector<1x256xf32> -> vector<1x256xf32>
    %c0_56 = arith.constant 0 : index
    %c0_57 = arith.constant 0 : index
    %124 = vector.load %arg21[%c0_56, %c0_57] : memref<1x256xf32, #tpu.memory_space<vmem>>, vector<1x256xf32>
    %125 = arith.addf %123, %124 : vector<1x256xf32>
    %cst_58 = arith.constant 0.000000e+00 : f32
    %126 = vector.broadcast %cst_58 : f32 to vector<1x256xf32>
    %127 = arith.maximumf %125, %126 : vector<1x256xf32>
    %128 = vector.broadcast %127 : vector<1x256xf32> to vector<16x256xf32>
    %129 = arith.mulf %128, %95 : vector<16x256xf32>
    %c0_59 = arith.constant 0 : index
    %c0_60 = arith.constant 0 : index
    %130 = vector.load %arg13[%c0_59, %c0_60] : memref<256x16xf32, #tpu.memory_space<vmem>>, vector<256x16xf32>
    %cst_61 = arith.constant dense<0.000000e+00> : vector<16x16xf32>
    %131 = tpu.matmul %129, %130, %cst_61 {dimension_numbers = #tpu.dot_dimension_numbers<[1], [0], [0], [1], [0, 0, 1, 1], [], []>} : vector<16x256xf32>, vector<256x16xf32>, vector<16x16xf32> -> vector<16x16xf32>
    %132 = arith.truncf %131 : vector<16x16xf32> to vector<16x16xbf16>
    %c0_62 = arith.constant 0 : index
    %c0_63 = arith.constant 0 : index
    %133 = vector.load %arg22[%c0_62, %c0_63] : memref<16x64xbf16, #tpu.memory_space<vmem>>, vector<16x64xbf16>
    %cst_64 = arith.constant dense<0.000000e+00> : vector<16x64xf32>
    %134 = tpu.matmul %132, %133, %cst_64 {dimension_numbers = #tpu.dot_dimension_numbers<[1], [0], [0], [1], [0, 0, 1, 1], [], []>} : vector<16x16xbf16>, vector<16x64xbf16>, vector<16x64xf32> -> vector<16x64xf32>
    %c0_65 = arith.constant 0 : index
    %c0_66 = arith.constant 0 : index
    %135 = vector.load %arg9[%c0_65, %c0_66] : memref<9x64xf32, #tpu.memory_space<vmem>>, vector<9x64xf32>
    %c9_i32_67 = arith.constant 9 : i32
    %136 = tpu.dynamic_rotate %134 by %c9_i32_67 dim 1 : vector<16x64xf32>, i32 -> vector<16x64xf32>
    %137 = vector.extract_strided_slice %135 {offsets = [0, 0], sizes = [1, 64], strides = [1, 1]} : vector<9x64xf32> to vector<1x64xf32>
    %138 = vector.broadcast %137 : vector<1x64xf32> to vector<16x64xf32>
    %139 = arith.mulf %136, %138 : vector<16x64xf32>
    %c8_i32_68 = arith.constant 8 : i32
    %140 = tpu.dynamic_rotate %134 by %c8_i32_68 dim 1 : vector<16x64xf32>, i32 -> vector<16x64xf32>
    %141 = vector.extract_strided_slice %135 {offsets = [1, 0], sizes = [1, 64], strides = [1, 1]} : vector<9x64xf32> to vector<1x64xf32>
    %142 = vector.broadcast %141 : vector<1x64xf32> to vector<16x64xf32>
    %143 = arith.mulf %140, %142 : vector<16x64xf32>
    %c7_i32_69 = arith.constant 7 : i32
    %144 = tpu.dynamic_rotate %134 by %c7_i32_69 dim 1 : vector<16x64xf32>, i32 -> vector<16x64xf32>
    %145 = vector.extract_strided_slice %135 {offsets = [2, 0], sizes = [1, 64], strides = [1, 1]} : vector<9x64xf32> to vector<1x64xf32>
    %146 = vector.broadcast %145 : vector<1x64xf32> to vector<16x64xf32>
    %147 = arith.mulf %144, %146 : vector<16x64xf32>
    %c1_i32_70 = arith.constant 1 : i32
    %148 = tpu.dynamic_rotate %134 by %c1_i32_70 dim 1 : vector<16x64xf32>, i32 -> vector<16x64xf32>
    %149 = vector.extract_strided_slice %135 {offsets = [3, 0], sizes = [1, 64], strides = [1, 1]} : vector<9x64xf32> to vector<1x64xf32>
    %150 = vector.broadcast %149 : vector<1x64xf32> to vector<16x64xf32>
    %151 = arith.mulf %148, %150 : vector<16x64xf32>
    %c63_i32_71 = arith.constant 63 : i32
    %152 = tpu.dynamic_rotate %134 by %c63_i32_71 dim 1 : vector<16x64xf32>, i32 -> vector<16x64xf32>
    %153 = vector.extract_strided_slice %135 {offsets = [5, 0], sizes = [1, 64], strides = [1, 1]} : vector<9x64xf32> to vector<1x64xf32>
    %154 = vector.broadcast %153 : vector<1x64xf32> to vector<16x64xf32>
    %155 = arith.mulf %152, %154 : vector<16x64xf32>
    %c57_i32_72 = arith.constant 57 : i32
    %156 = tpu.dynamic_rotate %134 by %c57_i32_72 dim 1 : vector<16x64xf32>, i32 -> vector<16x64xf32>
    %157 = vector.extract_strided_slice %135 {offsets = [6, 0], sizes = [1, 64], strides = [1, 1]} : vector<9x64xf32> to vector<1x64xf32>
    %158 = vector.broadcast %157 : vector<1x64xf32> to vector<16x64xf32>
    %159 = arith.mulf %156, %158 : vector<16x64xf32>
    %c56_i32_73 = arith.constant 56 : i32
    %160 = tpu.dynamic_rotate %134 by %c56_i32_73 dim 1 : vector<16x64xf32>, i32 -> vector<16x64xf32>
    %161 = vector.extract_strided_slice %135 {offsets = [7, 0], sizes = [1, 64], strides = [1, 1]} : vector<9x64xf32> to vector<1x64xf32>
    %162 = vector.broadcast %161 : vector<1x64xf32> to vector<16x64xf32>
    %163 = arith.mulf %160, %162 : vector<16x64xf32>
    %c55_i32_74 = arith.constant 55 : i32
    %164 = tpu.dynamic_rotate %134 by %c55_i32_74 dim 1 : vector<16x64xf32>, i32 -> vector<16x64xf32>
    %165 = vector.extract_strided_slice %135 {offsets = [8, 0], sizes = [1, 64], strides = [1, 1]} : vector<9x64xf32> to vector<1x64xf32>
    %166 = vector.broadcast %165 : vector<1x64xf32> to vector<16x64xf32>
    %167 = arith.mulf %164, %166 : vector<16x64xf32>
    %168 = tpu.concatenate %139, %143, %147, %151, %134, %155, %159, %163, %167 in 0 : vector<16x64xf32>, vector<16x64xf32>, vector<16x64xf32>, vector<16x64xf32>, vector<16x64xf32>, vector<16x64xf32>, vector<16x64xf32>, vector<16x64xf32>, vector<16x64xf32> -> vector<144x64xf32>
    %169 = arith.truncf %168 : vector<144x64xf32> to vector<144x64xbf16>
    %c0_75 = arith.constant 0 : index
    %c0_76 = arith.constant 0 : index
    %170 = vector.load %arg23[%c0_75, %c0_76] : memref<8x144xbf16, #tpu.memory_space<vmem>>, vector<8x144xbf16>
    %cst_77 = arith.constant dense<0.000000e+00> : vector<8x64xf32>
    %171 = tpu.matmul %170, %169, %cst_77 {dimension_numbers = #tpu.dot_dimension_numbers<[1], [0], [0], [1], [0, 0, 1, 1], [], []>} : vector<8x144xbf16>, vector<144x64xbf16>, vector<8x64xf32> -> vector<8x64xf32>
    %c0_78 = arith.constant 0 : index
    %c0_79 = arith.constant 0 : index
    %172 = vector.load %arg24[%c0_78, %c0_79] : memref<8x1xf32, #tpu.memory_space<vmem>>, vector<8x1xf32>
    %173 = vector.broadcast %172 : vector<8x1xf32> to vector<8x64xf32>
    %174 = arith.addf %171, %173 : vector<8x64xf32>
    %cst_80 = arith.constant 0.000000e+00 : f32
    %175 = vector.broadcast %cst_80 : f32 to vector<8x64xf32>
    %176 = arith.maximumf %174, %175 : vector<8x64xf32>
    %177 = arith.truncf %176 : vector<8x64xf32> to vector<8x64xbf16>
    %c0_81 = arith.constant 0 : index
    %c0_82 = arith.constant 0 : index
    %178 = vector.load %arg25[%c0_81, %c0_82] : memref<64x256xbf16, #tpu.memory_space<vmem>>, vector<64x256xbf16>
    %cst_83 = arith.constant dense<0.000000e+00> : vector<8x256xf32>
    %179 = tpu.matmul %177, %178, %cst_83 {dimension_numbers = #tpu.dot_dimension_numbers<[1], [0], [0], [1], [0, 0, 1, 1], [], []>} : vector<8x64xbf16>, vector<64x256xbf16>, vector<8x256xf32> -> vector<8x256xf32>
    %c0_84 = arith.constant 0 : index
    %c0_85 = arith.constant 0 : index
    %180 = vector.load %arg5[%c0_84, %c0_85] : memref<9x256xf32, #tpu.memory_space<vmem>>, vector<9x256xf32>
    %c17_i32_86 = arith.constant 17 : i32
    %181 = tpu.dynamic_rotate %179 by %c17_i32_86 dim 1 : vector<8x256xf32>, i32 -> vector<8x256xf32>
    %182 = vector.extract_strided_slice %180 {offsets = [0, 0], sizes = [1, 256], strides = [1, 1]} : vector<9x256xf32> to vector<1x256xf32>
    %183 = vector.broadcast %182 : vector<1x256xf32> to vector<8x256xf32>
    %184 = arith.mulf %181, %183 : vector<8x256xf32>
    %c16_i32_87 = arith.constant 16 : i32
    %185 = tpu.dynamic_rotate %179 by %c16_i32_87 dim 1 : vector<8x256xf32>, i32 -> vector<8x256xf32>
    %186 = vector.extract_strided_slice %180 {offsets = [1, 0], sizes = [1, 256], strides = [1, 1]} : vector<9x256xf32> to vector<1x256xf32>
    %187 = vector.broadcast %186 : vector<1x256xf32> to vector<8x256xf32>
    %188 = arith.mulf %185, %187 : vector<8x256xf32>
    %c15_i32_88 = arith.constant 15 : i32
    %189 = tpu.dynamic_rotate %179 by %c15_i32_88 dim 1 : vector<8x256xf32>, i32 -> vector<8x256xf32>
    %190 = vector.extract_strided_slice %180 {offsets = [2, 0], sizes = [1, 256], strides = [1, 1]} : vector<9x256xf32> to vector<1x256xf32>
    %191 = vector.broadcast %190 : vector<1x256xf32> to vector<8x256xf32>
    %192 = arith.mulf %189, %191 : vector<8x256xf32>
    %c1_i32_89 = arith.constant 1 : i32
    %193 = tpu.dynamic_rotate %179 by %c1_i32_89 dim 1 : vector<8x256xf32>, i32 -> vector<8x256xf32>
    %194 = vector.extract_strided_slice %180 {offsets = [3, 0], sizes = [1, 256], strides = [1, 1]} : vector<9x256xf32> to vector<1x256xf32>
    %195 = vector.broadcast %194 : vector<1x256xf32> to vector<8x256xf32>
    %196 = arith.mulf %193, %195 : vector<8x256xf32>
    %c255_i32_90 = arith.constant 255 : i32
    %197 = tpu.dynamic_rotate %179 by %c255_i32_90 dim 1 : vector<8x256xf32>, i32 -> vector<8x256xf32>
    %198 = vector.extract_strided_slice %180 {offsets = [5, 0], sizes = [1, 256], strides = [1, 1]} : vector<9x256xf32> to vector<1x256xf32>
    %199 = vector.broadcast %198 : vector<1x256xf32> to vector<8x256xf32>
    %200 = arith.mulf %197, %199 : vector<8x256xf32>
    %c241_i32_91 = arith.constant 241 : i32
    %201 = tpu.dynamic_rotate %179 by %c241_i32_91 dim 1 : vector<8x256xf32>, i32 -> vector<8x256xf32>
    %202 = vector.extract_strided_slice %180 {offsets = [6, 0], sizes = [1, 256], strides = [1, 1]} : vector<9x256xf32> to vector<1x256xf32>
    %203 = vector.broadcast %202 : vector<1x256xf32> to vector<8x256xf32>
    %204 = arith.mulf %201, %203 : vector<8x256xf32>
    %c240_i32_92 = arith.constant 240 : i32
    %205 = tpu.dynamic_rotate %179 by %c240_i32_92 dim 1 : vector<8x256xf32>, i32 -> vector<8x256xf32>
    %206 = vector.extract_strided_slice %180 {offsets = [7, 0], sizes = [1, 256], strides = [1, 1]} : vector<9x256xf32> to vector<1x256xf32>
    %207 = vector.broadcast %206 : vector<1x256xf32> to vector<8x256xf32>
    %208 = arith.mulf %205, %207 : vector<8x256xf32>
    %c239_i32_93 = arith.constant 239 : i32
    %209 = tpu.dynamic_rotate %179 by %c239_i32_93 dim 1 : vector<8x256xf32>, i32 -> vector<8x256xf32>
    %210 = vector.extract_strided_slice %180 {offsets = [8, 0], sizes = [1, 256], strides = [1, 1]} : vector<9x256xf32> to vector<1x256xf32>
    %211 = vector.broadcast %210 : vector<1x256xf32> to vector<8x256xf32>
    %212 = arith.mulf %209, %211 : vector<8x256xf32>
    %213 = tpu.concatenate %184, %188, %192, %196, %179, %200, %204, %208, %212 in 0 : vector<8x256xf32>, vector<8x256xf32>, vector<8x256xf32>, vector<8x256xf32>, vector<8x256xf32>, vector<8x256xf32>, vector<8x256xf32>, vector<8x256xf32>, vector<8x256xf32> -> vector<72x256xf32>
    %214 = arith.truncf %213 : vector<72x256xf32> to vector<72x256xbf16>
    %c0_94 = arith.constant 0 : index
    %c0_95 = arith.constant 0 : index
    %215 = vector.load %arg26[%c0_94, %c0_95] : memref<4x72xbf16, #tpu.memory_space<vmem>>, vector<4x72xbf16>
    %cst_96 = arith.constant dense<0.000000e+00> : vector<4x256xf32>
    %216 = tpu.matmul %215, %214, %cst_96 {dimension_numbers = #tpu.dot_dimension_numbers<[1], [0], [0], [1], [0, 0, 1, 1], [], []>} : vector<4x72xbf16>, vector<72x256xbf16>, vector<4x256xf32> -> vector<4x256xf32>
    %c0_97 = arith.constant 0 : index
    %c0_98 = arith.constant 0 : index
    %217 = vector.load %arg27[%c0_97, %c0_98] : memref<4x1xf32, #tpu.memory_space<vmem>>, vector<4x1xf32>
    %218 = vector.broadcast %217 : vector<4x1xf32> to vector<4x256xf32>
    %219 = arith.addf %216, %218 : vector<4x256xf32>
    %cst_99 = arith.constant dense<0xFF800000> : vector<256xf32>
    %220 = vector.multi_reduction <maximumf>, %219, %cst_99 [0] : vector<4x256xf32> to vector<256xf32>
    %221 = vector.shape_cast %220 : vector<256xf32> to vector<1x256xf32>
    %222 = vector.broadcast %221 : vector<1x256xf32> to vector<4x256xf32>
    %223 = arith.subf %219, %222 : vector<4x256xf32>
    %224 = math.exp %223 : vector<4x256xf32>
    %cst_100 = arith.constant dense<0.000000e+00> : vector<256xf32>
    %225 = vector.multi_reduction <add>, %224, %cst_100 [0] : vector<4x256xf32> to vector<256xf32>
    %226 = vector.shape_cast %225 : vector<256xf32> to vector<1x256xf32>
    %227 = math.log %226 : vector<1x256xf32>
    %228 = arith.addf %221, %227 : vector<1x256xf32>
    %229 = vector.broadcast %228 : vector<1x256xf32> to vector<4x256xf32>
    %230 = arith.subf %219, %229 : vector<4x256xf32>
    %c0_101 = arith.constant 0 : index
    %c0_102 = arith.constant 0 : index
    %231 = vector.load %arg28[%c0_101, %c0_102] : memref<4x256xf32, #tpu.memory_space<vmem>>, vector<4x256xf32>
    tpu.vector_store %arg28[%c0_101, %c0_102], %230 {strides = array<i32>} : memref<4x256xf32, #tpu.memory_space<vmem>>, vector<4x256xf32>,
    return
  }
  func.func @transform_0(%arg0: i32) -> (i32, i32) {
    %c0_i32 = arith.constant 0 : i32
    %c0_i32_0 = arith.constant 0 : i32
    return %c0_i32, %arg0 : i32, i32
  }
  func.func @transform_1(%arg0: i32) -> (i32, i32) {
    %c0_i32 = arith.constant 0 : i32
    %c0_i32_0 = arith.constant 0 : i32
    return %c0_i32, %arg0 : i32, i32
  }
  func.func @transform_2(%arg0: i32) -> (i32, i32) {
    %c0_i32 = arith.constant 0 : i32
    %c0_i32_0 = arith.constant 0 : i32
    %c0_i32_1 = arith.constant 0 : i32
    return %c0_i32, %c0_i32_0 : i32, i32
  }
  func.func @transform_3(%arg0: i32) -> (i32, i32) {
    %c0_i32 = arith.constant 0 : i32
    %c0_i32_0 = arith.constant 0 : i32
    %c0_i32_1 = arith.constant 0 : i32
    return %c0_i32, %c0_i32_0 : i32, i32
  }
  func.func @transform_4(%arg0: i32) -> (i32, i32) {
    %c0_i32 = arith.constant 0 : i32
    %c0_i32_0 = arith.constant 0 : i32
    %c0_i32_1 = arith.constant 0 : i32
    return %c0_i32, %c0_i32_0 : i32, i32
  }
  func.func @transform_5(%arg0: i32) -> (i32, i32) {
    %c0_i32 = arith.constant 0 : i32
    %c0_i32_0 = arith.constant 0 : i32
    %c0_i32_1 = arith.constant 0 : i32
    return %c0_i32, %c0_i32_0 : i32, i32
  }
  func.func @transform_6(%arg0: i32) -> (i32, i32) {
    %c0_i32 = arith.constant 0 : i32
    %c0_i32_0 = arith.constant 0 : i32
    %c0_i32_1 = arith.constant 0 : i32
    return %c0_i32, %c0_i32_0 : i32, i32
  }
  func.func @transform_7(%arg0: i32) -> (i32, i32) {
    %c0_i32 = arith.constant 0 : i32
    %c0_i32_0 = arith.constant 0 : i32
    %c0_i32_1 = arith.constant 0 : i32
    return %c0_i32, %c0_i32_0 : i32, i32
  }
  func.func @transform_8(%arg0: i32) -> (i32, i32) {
    %c0_i32 = arith.constant 0 : i32
    %c0_i32_0 = arith.constant 0 : i32
    %c0_i32_1 = arith.constant 0 : i32
    return %c0_i32, %c0_i32_0 : i32, i32
  }
  func.func @transform_9(%arg0: i32) -> (i32, i32) {
    %c0_i32 = arith.constant 0 : i32
    %c0_i32_0 = arith.constant 0 : i32
    %c0_i32_1 = arith.constant 0 : i32
    return %c0_i32, %c0_i32_0 : i32, i32
  }
  func.func @transform_10(%arg0: i32) -> (i32, i32) {
    %c0_i32 = arith.constant 0 : i32
    %c0_i32_0 = arith.constant 0 : i32
    %c0_i32_1 = arith.constant 0 : i32
    return %c0_i32, %c0_i32_0 : i32, i32
  }
  func.func @transform_11(%arg0: i32) -> (i32, i32) {
    %c0_i32 = arith.constant 0 : i32
    %c0_i32_0 = arith.constant 0 : i32
    %c0_i32_1 = arith.constant 0 : i32
    return %c0_i32, %c0_i32_0 : i32, i32
  }
  func.func @transform_12(%arg0: i32) -> (i32, i32) {
    %c0_i32 = arith.constant 0 : i32
    %c0_i32_0 = arith.constant 0 : i32
    %c0_i32_1 = arith.constant 0 : i32
    return %c0_i32, %c0_i32_0 : i32, i32
  }
  func.func @transform_13(%arg0: i32) -> (i32, i32) {
    %c0_i32 = arith.constant 0 : i32
    %c0_i32_0 = arith.constant 0 : i32
    %c0_i32_1 = arith.constant 0 : i32
    return %c0_i32, %c0_i32_0 : i32, i32
  }
  func.func @transform_14(%arg0: i32) -> (i32, i32) {
    %c0_i32 = arith.constant 0 : i32
    %c0_i32_0 = arith.constant 0 : i32
    %c0_i32_1 = arith.constant 0 : i32
    return %c0_i32, %c0_i32_0 : i32, i32
  }
  func.func @transform_15(%arg0: i32) -> (i32, i32) {
    %c0_i32 = arith.constant 0 : i32
    %c0_i32_0 = arith.constant 0 : i32
    %c0_i32_1 = arith.constant 0 : i32
    return %c0_i32, %c0_i32_0 : i32, i32
  }
  func.func @transform_16(%arg0: i32) -> (i32, i32) {
    %c0_i32 = arith.constant 0 : i32
    %c0_i32_0 = arith.constant 0 : i32
    %c0_i32_1 = arith.constant 0 : i32
    return %c0_i32, %c0_i32_0 : i32, i32
  }
  func.func @transform_17(%arg0: i32) -> (i32, i32) {
    %c0_i32 = arith.constant 0 : i32
    %c0_i32_0 = arith.constant 0 : i32
    %c0_i32_1 = arith.constant 0 : i32
    return %c0_i32, %c0_i32_0 : i32, i32
  }
  func.func @transform_18(%arg0: i32) -> (i32, i32) {
    %c0_i32 = arith.constant 0 : i32
    %c0_i32_0 = arith.constant 0 : i32
    %c0_i32_1 = arith.constant 0 : i32
    return %c0_i32, %c0_i32_0 : i32, i32
  }
  func.func @transform_19(%arg0: i32) -> (i32, i32) {
    %c0_i32 = arith.constant 0 : i32
    %c0_i32_0 = arith.constant 0 : i32
    %c0_i32_1 = arith.constant 0 : i32
    return %c0_i32, %c0_i32_0 : i32, i32
  }
  func.func @transform_20(%arg0: i32) -> (i32, i32) {
    %c0_i32 = arith.constant 0 : i32
    %c0_i32_0 = arith.constant 0 : i32
    %c0_i32_1 = arith.constant 0 : i32
    return %c0_i32, %c0_i32_0 : i32, i32
  }
  func.func @transform_21(%arg0: i32) -> (i32, i32) {
    %c0_i32 = arith.constant 0 : i32
    %c0_i32_0 = arith.constant 0 : i32
    %c0_i32_1 = arith.constant 0 : i32
    return %c0_i32, %c0_i32_0 : i32, i32
  }
  func.func @transform_22(%arg0: i32) -> (i32, i32) {
    %c0_i32 = arith.constant 0 : i32
    %c0_i32_0 = arith.constant 0 : i32
    %c0_i32_1 = arith.constant 0 : i32
    return %c0_i32, %c0_i32_0 : i32, i32
  }
  func.func @transform_23(%arg0: i32) -> (i32, i32) {
    %c0_i32 = arith.constant 0 : i32
    %c0_i32_0 = arith.constant 0 : i32
    %c0_i32_1 = arith.constant 0 : i32
    return %c0_i32, %c0_i32_0 : i32, i32
  }
  func.func @transform_24(%arg0: i32) -> (i32, i32) {
    %c0_i32 = arith.constant 0 : i32
    %c0_i32_0 = arith.constant 0 : i32
    %c0_i32_1 = arith.constant 0 : i32
    return %c0_i32, %c0_i32_0 : i32, i32
  }
  func.func @transform_25(%arg0: i32) -> (i32, i32) {
    %c0_i32 = arith.constant 0 : i32
    %c0_i32_0 = arith.constant 0 : i32
    %c0_i32_1 = arith.constant 0 : i32
    return %c0_i32, %c0_i32_0 : i32, i32
  }
  func.func @transform_26(%arg0: i32) -> (i32, i32) {
    %c0_i32 = arith.constant 0 : i32
    %c0_i32_0 = arith.constant 0 : i32
    %c0_i32_1 = arith.constant 0 : i32
    return %c0_i32, %c0_i32_0 : i32, i32
  }
  func.func @transform_27(%arg0: i32) -> (i32, i32) {
    %c0_i32 = arith.constant 0 : i32
    %c0_i32_0 = arith.constant 0 : i32
    return %c0_i32, %arg0 : i32, i32
  }
  func.func @transform_28(%arg0: i32) -> (i32, i32, i32) {
    %c0_i32 = arith.constant 0 : i32
    %c0_i32_0 = arith.constant 0 : i32
    %c0_i32_1 = arith.constant 0 : i32
    return %arg0, %c0_i32, %c0_i32_0 : i32, i32, i32
  }
}

</mosaic_0001>

<llo_original>
// kernel: cnn_autoencoder_forward.1
$region0: #{cnn_autoencoder_forward.1}
  #allocation0 [shape = 'u32[]', space=smem, size = 0x4, offset = 0x4, fixed_abs, tag = 'smem constant byte address 0x4 - core index']
  #allocation1 [shape = 'u32[72,128]{1,0:T(1,128)}', space=vmem, size = 0x9000, scoped, tag = 'internal scratch']
  %s0 = inlined_call_operand.vmem [shape: f32[8,512], index: 0, kind: input, shape index: {}]
  %s1 = inlined_call_operand.vmem [shape: f32[8,512], index: 1, kind: input, shape index: {}]
  %s2 = inlined_call_operand.vmem [shape: bf16[8,72], index: 2, kind: input, shape index: {}]
  %s3 = inlined_call_operand.vmem [shape: f32[8,1], index: 3, kind: input, shape index: {}]
  %s4 = inlined_call_operand.vmem [shape: f32[9,256], index: 4, kind: input, shape index: {}]
  %s5 = inlined_call_operand.vmem [shape: bf16[256,64], index: 5, kind: input, shape index: {}]
  %s6 = inlined_call_operand.vmem [shape: bf16[16,72], index: 6, kind: input, shape index: {}]
  %s7 = inlined_call_operand.vmem [shape: f32[16,1], index: 7, kind: input, shape index: {}]
  %s8 = inlined_call_operand.vmem [shape: f32[9,64], index: 8, kind: input, shape index: {}]
  %s9 = inlined_call_operand.vmem [shape: bf16[64,16], index: 9, kind: input, shape index: {}]
  %s10 = inlined_call_operand.vmem [shape: f32[16,256], index: 10, kind: input, shape index: {}]
  %s11 = inlined_call_operand.vmem [shape: f32[16,256], index: 11, kind: input, shape index: {}]
  %s12 = inlined_call_operand.vmem [shape: f32[256,16], index: 12, kind: input, shape index: {}]
  %s13 = inlined_call_operand.vmem [shape: f32[256,64], index: 13, kind: input, shape index: {}]
  %s14 = inlined_call_operand.vmem [shape: f32[1,64], index: 14, kind: input, shape index: {}]
  %s15 = inlined_call_operand.vmem [shape: f32[64,32], index: 15, kind: input, shape index: {}]
  %s16 = inlined_call_operand.vmem [shape: f32[1,32], index: 16, kind: input, shape index: {}]
  %s17 = inlined_call_operand.vmem [shape: f32[32,64], index: 17, kind: input, shape index: {}]
  %s18 = inlined_call_operand.vmem [shape: f32[1,64], index: 18, kind: input, shape index: {}]
  %s19 = inlined_call_operand.vmem [shape: f32[64,256], index: 19, kind: input, shape index: {}]
  %s20 = inlined_call_operand.vmem [shape: f32[1,256], index: 20, kind: input, shape index: {}]
  %s21 = inlined_call_operand.vmem [shape: bf16[16,64], index: 21, kind: input, shape index: {}]
  %s22 = inlined_call_operand.vmem [shape: bf16[8,144], index: 22, kind: input, shape index: {}]
  %s23 = inlined_call_operand.vmem [shape: f32[8,1], index: 23, kind: input, shape index: {}]
  %s24 = inlined_call_operand.vmem [shape: bf16[64,256], index: 24, kind: input, shape index: {}]
  %s25 = inlined_call_operand.vmem [shape: bf16[4,72], index: 25, kind: input, shape index: {}]
  %s26 = inlined_call_operand.vmem [shape: f32[4,1], index: 26, kind: input, shape index: {}]
  %s27 = inlined_call_operand.vmem [shape: f32[4,512], index: 27, kind: output, shape index: {0}]
  %s28 = inlined_call_operand.hbm [shape: f32[2,1,32], index: 28, kind: output, shape index: {1}]
  %29 = xla_tuple %s27, %s28
  %s30 = sld [smem:[#allocation0]]
  $region149: #{cnn_autoencoder_forward.1} parent=0
    _
  %s32 = ssub.s32 1, %s30
  %s33 = scalar_select 0, %s32, %s30
  $region1: #{cnn_autoencoder_forward.1} parent=0
    #allocation2 [shape = 'u8[1024]{0}', space=vmem, size = 0x400, scoped, tag = 'output window, operand 1']
    #allocation3 [shape = 's32[2]{0}', space=sflag, size = 0x8, scoped, tag = 'scoped memory for cnn_autoencoder_forward.1']
    %34 = vsyncpa [#allocation3], 0
    %s35 = scalar_lea.sflag [#allocation3], 1
    %36 = vsyncpa %s35, 0
    loop: start=0, step=1, limit=4
    $region2: #{cnn_autoencoder_forward.1} parent=1 // loop_pre_header
      _
    $region3: #{cnn_autoencoder_forward.1} parent=1 // loop_header
      %s38 = sphi 0, %s42
      %p39 = scmp.ge.s32.totalorder %s38, 4
      %s48 = sphi 0, %s50
      %s51 = sphi 0, %s48
      %s52 = sphi 0, %s51
      %s68 = sphi 0, %s52
      %s74 = sphi 0, %s76
      %s77 = sphi 0, %s74
      %s78 = sphi 0, %s77
      %s94 = sphi 0, %s78
      %s98 = sphi 0, %s98
      %s100 = sphi 0, %s98
      %s101 = sphi 0, %s100
      %s115 = sphi 0, %s101
      %s119 = sphi 0, %s119
      %s121 = sphi 0, %s119
      %s122 = sphi 0, %s121
      %s136 = sphi 0, %s122
      %s140 = sphi 0, %s140
      %s142 = sphi 0, %s140
      %s143 = sphi 0, %s142
      %s157 = sphi 0, %s143
      %s161 = sphi 0, %s161
      %s163 = sphi 0, %s161
      %s164 = sphi 0, %s163
      %s178 = sphi 0, %s164
      %s182 = sphi 0, %s182
      %s184 = sphi 0, %s182
      %s185 = sphi 0, %s184
      %s199 = sphi 0, %s185
      %s203 = sphi 0, %s203
      %s205 = sphi 0, %s203
      %s206 = sphi 0, %s205
      %s220 = sphi 0, %s206
      %s224 = sphi 0, %s224
      %s226 = sphi 0, %s224
      %s227 = sphi 0, %s226
      %s241 = sphi 0, %s227
      %s245 = sphi 0, %s245
      %s247 = sphi 0, %s245
      %s248 = sphi 0, %s247
      %s262 = sphi 0, %s248
      %s266 = sphi 0, %s266
      %s268 = sphi 0, %s266
      %s269 = sphi 0, %s268
      %s283 = sphi 0, %s269
      %s287 = sphi 0, %s287
      %s289 = sphi 0, %s287
      %s290 = sphi 0, %s289
      %s304 = sphi 0, %s290
      %s308 = sphi 0, %s308
      %s310 = sphi 0, %s308
      %s311 = sphi 0, %s310
      %s325 = sphi 0, %s311
      %s329 = sphi 0, %s329
      %s331 = sphi 0, %s329
      %s332 = sphi 0, %s331
      %s346 = sphi 0, %s332
      %s350 = sphi 0, %s350
      %s352 = sphi 0, %s350
      %s353 = sphi 0, %s352
      %s367 = sphi 0, %s353
      %s371 = sphi 0, %s371
      %s373 = sphi 0, %s371
      %s374 = sphi 0, %s373
      %s388 = sphi 0, %s374
      %s392 = sphi 0, %s392
      %s394 = sphi 0, %s392
      %s395 = sphi 0, %s394
      %s409 = sphi 0, %s395
      %s413 = sphi 0, %s413
      %s415 = sphi 0, %s413
      %s416 = sphi 0, %s415
      %s430 = sphi 0, %s416
      %s434 = sphi 0, %s434
      %s436 = sphi 0, %s434
      %s437 = sphi 0, %s436
      %s451 = sphi 0, %s437
      %s455 = sphi 0, %s455
      %s457 = sphi 0, %s455
      %s458 = sphi 0, %s457
      %s472 = sphi 0, %s458
      %s476 = sphi 0, %s476
      %s478 = sphi 0, %s476
      %s479 = sphi 0, %s478
      %s493 = sphi 0, %s479
      %s497 = sphi 0, %s497
      %s499 = sphi 0, %s497
      %s500 = sphi 0, %s499
      %s514 = sphi 0, %s500
      %s518 = sphi 0, %s518
      %s520 = sphi 0, %s518
      %s521 = sphi 0, %s520
      %s535 = sphi 0, %s521
      %s539 = sphi 0, %s539
      %s541 = sphi 0, %s539
      %s542 = sphi 0, %s541
      %s556 = sphi 0, %s542
      %s560 = sphi 0, %s560
      %s562 = sphi 0, %s560
      %s563 = sphi 0, %s562
      %s577 = sphi 0, %s563
      %s581 = sphi 0, %s581
      %s583 = sphi 0, %s581
      %s584 = sphi 0, %s583
      %s598 = sphi 0, %s584
      %s602 = sphi 0, %s602
      %s604 = sphi 0, %s602
      %s605 = sphi 0, %s604
      %s619 = sphi 0, %s605
      %s625 = sphi 0, %s627
      %s628 = sphi 0, %s625
      %s629 = sphi 0, %s628
      %s645 = sphi 0, %s629
      %s651 = sphi 0, %s653
      %s654 = sphi 0, %s651
      %s655 = sphi 0, %s654
      %s671 = sphi 0, %s655
    $region4: #{cnn_autoencoder_forward.1} parent=1 // loop_header_branch
      %41 = sbr.rel (%p39) target = $region8
    $region5: #{cnn_autoencoder_forward.1} parent=1 // loop_body
      %s43 = ssub.s32 %s38, 1
      %s44 = ssub.s32 %s38, 2
      %s45 = sadd.s32 %s38, 1
      %s46 = ssub.s32 %s38, %s45
      %p47 = scmp.eq.s32.totalorder %s46, 0
      %s49 = sadd.s32 %s48, 1
      %s50 = scalar_select %p47, %s48, %s49
      %p53 = pneg %p47
      %p54 = scmp.eq.s32.totalorder %s38, 1
      %p55 = por %p53, %p54
      %p56 = scmp.ne.s32.totalorder %s48, %s51
      %p57 = scmp.eq.s32.totalorder %s38, 0
      %p58 = por %p56, %p57
      %p59 = scmp.ne.s32.totalorder %s48, %s51
      %p60 = scmp.eq.s32.totalorder %s43, 1
      %p61 = por %p59, %p60
      %p62 = scmp.ne.s32.totalorder %s51, %s52
      %p63 = scmp.eq.s32.totalorder %s43, 0
      %p64 = por %p62, %p63
      %p65 = scmp.ne.s32.totalorder %s51, %s52
      %p66 = scmp.eq.s32.totalorder %s44, 1
      %p67 = por %p65, %p66
      %p69 = scmp.ne.s32.totalorder %s52, %s68
      %p70 = scmp.eq.s32.totalorder %s44, 0
      %p71 = por %p69, %p70
      %s72 = ssub.s32 %s38, %s45
      %p73 = scmp.eq.s32.totalorder %s72, 0
      %s75 = sadd.s32 %s74, 1
      %s76 = scalar_select %p73, %s74, %s75
      %p79 = pneg %p73
      %p80 = scmp.eq.s32.totalorder %s38, 1
      %p81 = por %p79, %p80
      %p82 = scmp.ne.s32.totalorder %s74, %s77
      %p83 = scmp.eq.s32.totalorder %s38, 0
      %p84 = por %p82, %p83
      %p85 = scmp.ne.s32.totalorder %s74, %s77
      %p86 = scmp.eq.s32.totalorder %s43, 1
      %p87 = por %p85, %p86
      %p88 = scmp.ne.s32.totalorder %s77, %s78
      %p89 = scmp.eq.s32.totalorder %s43, 0
      %p90 = por %p88, %p89
      %p91 = scmp.ne.s32.totalorder %s77, %s78
      %p92 = scmp.eq.s32.totalorder %s44, 1
      %p93 = por %p91, %p92
      %p95 = scmp.ne.s32.totalorder %s78, %s94
      %p96 = scmp.eq.s32.totalorder %s44, 0
      %p97 = por %p95, %p96
      %s99 = sadd.s32 %s98, 1
      %p102 = scmp.eq.s32.totalorder %s38, 1
      %p103 = scmp.ne.s32.totalorder %s98, %s100
      %p104 = scmp.eq.s32.totalorder %s38, 0
      %p105 = por %p103, %p104
      %p106 = scmp.ne.s32.totalorder %s98, %s100
      %p107 = scmp.eq.s32.totalorder %s43, 1
      %p108 = por %p106, %p107
      %p109 = scmp.ne.s32.totalorder %s100, %s101
      %p110 = scmp.eq.s32.totalorder %s43, 0
      %p111 = por %p109, %p110
      %p112 = scmp.ne.s32.totalorder %s100, %s101
      %p113 = scmp.eq.s32.totalorder %s44, 1
      %p114 = por %p112, %p113
      %p116 = scmp.ne.s32.totalorder %s101, %s115
      %p117 = scmp.eq.s32.totalorder %s44, 0
      %p118 = por %p116, %p117
      %s120 = sadd.s32 %s119, 1
      %p123 = scmp.eq.s32.totalorder %s38, 1
      %p124 = scmp.ne.s32.totalorder %s119, %s121
      %p125 = scmp.eq.s32.totalorder %s38, 0
      %p126 = por %p124, %p125
      %p127 = scmp.ne.s32.totalorder %s119, %s121
      %p128 = scmp.eq.s32.totalorder %s43, 1
      %p129 = por %p127, %p128
      %p130 = scmp.ne.s32.totalorder %s121, %s122
      %p131 = scmp.eq.s32.totalorder %s43, 0
      %p132 = por %p130, %p131
      %p133 = scmp.ne.s32.totalorder %s121, %s122
      %p134 = scmp.eq.s32.totalorder %s44, 1
      %p135 = por %p133, %p134
      %p137 = scmp.ne.s32.totalorder %s122, %s136
      %p138 = scmp.eq.s32.totalorder %s44, 0
      %p139 = por %p137, %p138
      %s141 = sadd.s32 %s140, 1
      %p144 = scmp.eq.s32.totalorder %s38, 1
      %p145 = scmp.ne.s32.totalorder %s140, %s142
      %p146 = scmp.eq.s32.totalorder %s38, 0
      %p147 = por %p145, %p146
      %p148 = scmp.ne.s32.totalorder %s140, %s142
      %p149 = scmp.eq.s32.totalorder %s43, 1
      %p150 = por %p148, %p149
      %p151 = scmp.ne.s32.totalorder %s142, %s143
      %p152 = scmp.eq.s32.totalorder %s43, 0
      %p153 = por %p151, %p152
      %p154 = scmp.ne.s32.totalorder %s142, %s143
      %p155 = scmp.eq.s32.totalorder %s44, 1
      %p156 = por %p154, %p155
      %p158 = scmp.ne.s32.totalorder %s143, %s157
      %p159 = scmp.eq.s32.totalorder %s44, 0
      %p160 = por %p158, %p159
      %s162 = sadd.s32 %s161, 1
      %p165 = scmp.eq.s32.totalorder %s38, 1
      %p166 = scmp.ne.s32.totalorder %s161, %s163
      %p167 = scmp.eq.s32.totalorder %s38, 0
      %p168 = por %p166, %p167
      %p169 = scmp.ne.s32.totalorder %s161, %s163
      %p170 = scmp.eq.s32.totalorder %s43, 1
      %p171 = por %p169, %p170
      %p172 = scmp.ne.s32.totalorder %s163, %s164
      %p173 = scmp.eq.s32.totalorder %s43, 0
      %p174 = por %p172, %p173
      %p175 = scmp.ne.s32.totalorder %s163, %s164
      %p176 = scmp.eq.s32.totalorder %s44, 1
      %p177 = por %p175, %p176
      %p179 = scmp.ne.s32.totalorder %s164, %s178
      %p180 = scmp.eq.s32.totalorder %s44, 0
      %p181 = por %p179, %p180
      %s183 = sadd.s32 %s182, 1
      %p186 = scmp.eq.s32.totalorder %s38, 1
      %p187 = scmp.ne.s32.totalorder %s182, %s184
      %p188 = scmp.eq.s32.totalorder %s38, 0
      %p189 = por %p187, %p188
      %p190 = scmp.ne.s32.totalorder %s182, %s184
      %p191 = scmp.eq.s32.totalorder %s43, 1
      %p192 = por %p190, %p191
      %p193 = scmp.ne.s32.totalorder %s184, %s185
      %p194 = scmp.eq.s32.totalorder %s43, 0
      %p195 = por %p193, %p194
      %p196 = scmp.ne.s32.totalorder %s184, %s185
      %p197 = scmp.eq.s32.totalorder %s44, 1
      %p198 = por %p196, %p197
      %p200 = scmp.ne.s32.totalorder %s185, %s199
      %p201 = scmp.eq.s32.totalorder %s44, 0
      %p202 = por %p200, %p201
      %s204 = sadd.s32 %s203, 1
      %p207 = scmp.eq.s32.totalorder %s38, 1
      %p208 = scmp.ne.s32.totalorder %s203, %s205
      %p209 = scmp.eq.s32.totalorder %s38, 0
      %p210 = por %p208, %p209
      %p211 = scmp.ne.s32.totalorder %s203, %s205
      %p212 = scmp.eq.s32.totalorder %s43, 1
      %p213 = por %p211, %p212
      %p214 = scmp.ne.s32.totalorder %s205, %s206
      %p215 = scmp.eq.s32.totalorder %s43, 0
      %p216 = por %p214, %p215
      %p217 = scmp.ne.s32.totalorder %s205, %s206
      %p218 = scmp.eq.s32.totalorder %s44, 1
      %p219 = por %p217, %p218
      %p221 = scmp.ne.s32.totalorder %s206, %s220
      %p222 = scmp.eq.s32.totalorder %s44, 0
      %p223 = por %p221, %p222
      %s225 = sadd.s32 %s224, 1
      %p228 = scmp.eq.s32.totalorder %s38, 1
      %p229 = scmp.ne.s32.totalorder %s224, %s226
      %p230 = scmp.eq.s32.totalorder %s38, 0
      %p231 = por %p229, %p230
      %p232 = scmp.ne.s32.totalorder %s224, %s226
      %p233 = scmp.eq.s32.totalorder %s43, 1
      %p234 = por %p232, %p233
      %p235 = scmp.ne.s32.totalorder %s226, %s227
      %p236 = scmp.eq.s32.totalorder %s43, 0
      %p237 = por %p235, %p236
      %p238 = scmp.ne.s32.totalorder %s226, %s227
      %p239 = scmp.eq.s32.totalorder %s44, 1
      %p240 = por %p238, %p239
      %p242 = scmp.ne.s32.totalorder %s227, %s241
      %p243 = scmp.eq.s32.totalorder %s44, 0
      %p244 = por %p242, %p243
      %s246 = sadd.s32 %s245, 1
      %p249 = scmp.eq.s32.totalorder %s38, 1
      %p250 = scmp.ne.s32.totalorder %s245, %s247
      %p251 = scmp.eq.s32.totalorder %s38, 0
      %p252 = por %p250, %p251
      %p253 = scmp.ne.s32.totalorder %s245, %s247
      %p254 = scmp.eq.s32.totalorder %s43, 1
      %p255 = por %p253, %p254
      %p256 = scmp.ne.s32.totalorder %s247, %s248
      %p257 = scmp.eq.s32.totalorder %s43, 0
      %p258 = por %p256, %p257
      %p259 = scmp.ne.s32.totalorder %s247, %s248
      %p260 = scmp.eq.s32.totalorder %s44, 1
      %p261 = por %p259, %p260
      %p263 = scmp.ne.s32.totalorder %s248, %s262
      %p264 = scmp.eq.s32.totalorder %s44, 0
      %p265 = por %p263, %p264
      %s267 = sadd.s32 %s266, 1
      %p270 = scmp.eq.s32.totalorder %s38, 1
      %p271 = scmp.ne.s32.totalorder %s266, %s268
      %p272 = scmp.eq.s32.totalorder %s38, 0
      %p273 = por %p271, %p272
      %p274 = scmp.ne.s32.totalorder %s266, %s268
      %p275 = scmp.eq.s32.totalorder %s43, 1
      %p276 = por %p274, %p275
      %p277 = scmp.ne.s32.totalorder %s268, %s269
      %p278 = scmp.eq.s32.totalorder %s43, 0
      %p279 = por %p277, %p278
      %p280 = scmp.ne.s32.totalorder %s268, %s269
      %p281 = scmp.eq.s32.totalorder %s44, 1
      %p282 = por %p280, %p281
      %p284 = scmp.ne.s32.totalorder %s269, %s283
      %p285 = scmp.eq.s32.totalorder %s44, 0
      %p286 = por %p284, %p285
      %s288 = sadd.s32 %s287, 1
      %p291 = scmp.eq.s32.totalorder %s38, 1
      %p292 = scmp.ne.s32.totalorder %s287, %s289
      %p293 = scmp.eq.s32.totalorder %s38, 0
      %p294 = por %p292, %p293
      %p295 = scmp.ne.s32.totalorder %s287, %s289
      %p296 = scmp.eq.s32.totalorder %s43, 1
      %p297 = por %p295, %p296
      %p298 = scmp.ne.s32.totalorder %s289, %s290
      %p299 = scmp.eq.s32.totalorder %s43, 0
      %p300 = por %p298, %p299
      %p301 = scmp.ne.s32.totalorder %s289, %s290
      %p302 = scmp.eq.s32.totalorder %s44, 1
      %p303 = por %p301, %p302
      %p305 = scmp.ne.s32.totalorder %s290, %s304
      %p306 = scmp.eq.s32.totalorder %s44, 0
      %p307 = por %p305, %p306
      %s309 = sadd.s32 %s308, 1
      %p312 = scmp.eq.s32.totalorder %s38, 1
      %p313 = scmp.ne.s32.totalorder %s308, %s310
      %p314 = scmp.eq.s32.totalorder %s38, 0
      %p315 = por %p313, %p314
      %p316 = scmp.ne.s32.totalorder %s308, %s310
      %p317 = scmp.eq.s32.totalorder %s43, 1
      %p318 = por %p316, %p317
      %p319 = scmp.ne.s32.totalorder %s310, %s311
      %p320 = scmp.eq.s32.totalorder %s43, 0
      %p321 = por %p319, %p320
      %p322 = scmp.ne.s32.totalorder %s310, %s311
      %p323 = scmp.eq.s32.totalorder %s44, 1
      %p324 = por %p322, %p323
      %p326 = scmp.ne.s32.totalorder %s311, %s325
      %p327 = scmp.eq.s32.totalorder %s44, 0
      %p328 = por %p326, %p327
      %s330 = sadd.s32 %s329, 1
      %p333 = scmp.eq.s32.totalorder %s38, 1
      %p334 = scmp.ne.s32.totalorder %s329, %s331
      %p335 = scmp.eq.s32.totalorder %s38, 0
      %p336 = por %p334, %p335
      %p337 = scmp.ne.s32.totalorder %s329, %s331
      %p338 = scmp.eq.s32.totalorder %s43, 1
      %p339 = por %p337, %p338
      %p340 = scmp.ne.s32.totalorder %s331, %s332
      %p341 = scmp.eq.s32.totalorder %s43, 0
      %p342 = por %p340, %p341
      %p343 = scmp.ne.s32.totalorder %s331, %s332
      %p344 = scmp.eq.s32.totalorder %s44, 1
      %p345 = por %p343, %p344
      %p347 = scmp.ne.s32.totalorder %s332, %s346
      %p348 = scmp.eq.s32.totalorder %s44, 0
      %p349 = por %p347, %p348
      %s351 = sadd.s32 %s350, 1
      %p354 = scmp.eq.s32.totalorder %s38, 1
      %p355 = scmp.ne.s32.totalorder %s350, %s352
      %p356 = scmp.eq.s32.totalorder %s38, 0
      %p357 = por %p355, %p356
      %p358 = scmp.ne.s32.totalorder %s350, %s352
      %p359 = scmp.eq.s32.totalorder %s43, 1
      %p360 = por %p358, %p359
      %p361 = scmp.ne.s32.totalorder %s352, %s353
      %p362 = scmp.eq.s32.totalorder %s43, 0
      %p363 = por %p361, %p362
      %p364 = scmp.ne.s32.totalorder %s352, %s353
      %p365 = scmp.eq.s32.totalorder %s44, 1
      %p366 = por %p364, %p365
      %p368 = scmp.ne.s32.totalorder %s353, %s367
      %p369 = scmp.eq.s32.totalorder %s44, 0
      %p370 = por %p368, %p369
      %s372 = sadd.s32 %s371, 1
      %p375 = scmp.eq.s32.totalorder %s38, 1
      %p376 = scmp.ne.s32.totalorder %s371, %s373
      %p377 = scmp.eq.s32.totalorder %s38, 0
      %p378 = por %p376, %p377
      %p379 = scmp.ne.s32.totalorder %s371, %s373
      %p380 = scmp.eq.s32.totalorder %s43, 1
      %p381 = por %p379, %p380
      %p382 = scmp.ne.s32.totalorder %s373, %s374
      %p383 = scmp.eq.s32.totalorder %s43, 0
      %p384 = por %p382, %p383
      %p385 = scmp.ne.s32.totalorder %s373, %s374
      %p386 = scmp.eq.s32.totalorder %s44, 1
      %p387 = por %p385, %p386
      %p389 = scmp.ne.s32.totalorder %s374, %s388
      %p390 = scmp.eq.s32.totalorder %s44, 0
      %p391 = por %p389, %p390
      %s393 = sadd.s32 %s392, 1
      %p396 = scmp.eq.s32.totalorder %s38, 1
      %p397 = scmp.ne.s32.totalorder %s392, %s394
      %p398 = scmp.eq.s32.totalorder %s38, 0
      %p399 = por %p397, %p398
      %p400 = scmp.ne.s32.totalorder %s392, %s394
      %p401 = scmp.eq.s32.totalorder %s43, 1
      %p402 = por %p400, %p401
      %p403 = scmp.ne.s32.totalorder %s394, %s395
      %p404 = scmp.eq.s32.totalorder %s43, 0
      %p405 = por %p403, %p404
      %p406 = scmp.ne.s32.totalorder %s394, %s395
      %p407 = scmp.eq.s32.totalorder %s44, 1
      %p408 = por %p406, %p407
      %p410 = scmp.ne.s32.totalorder %s395, %s409
      %p411 = scmp.eq.s32.totalorder %s44, 0
      %p412 = por %p410, %p411
      %s414 = sadd.s32 %s413, 1
      %p417 = scmp.eq.s32.totalorder %s38, 1
      %p418 = scmp.ne.s32.totalorder %s413, %s415
      %p419 = scmp.eq.s32.totalorder %s38, 0
      %p420 = por %p418, %p419
      %p421 = scmp.ne.s32.totalorder %s413, %s415
      %p422 = scmp.eq.s32.totalorder %s43, 1
      %p423 = por %p421, %p422
      %p424 = scmp.ne.s32.totalorder %s415, %s416
      %p425 = scmp.eq.s32.totalorder %s43, 0
      %p426 = por %p424, %p425
      %p427 = scmp.ne.s32.totalorder %s415, %s416
      %p428 = scmp.eq.s32.totalorder %s44, 1
      %p429 = por %p427, %p428
      %p431 = scmp.ne.s32.totalorder %s416, %s430
      %p432 = scmp.eq.s32.totalorder %s44, 0
      %p433 = por %p431, %p432
      %s435 = sadd.s32 %s434, 1
      %p438 = scmp.eq.s32.totalorder %s38, 1
      %p439 = scmp.ne.s32.totalorder %s434, %s436
      %p440 = scmp.eq.s32.totalorder %s38, 0
      %p441 = por %p439, %p440
      %p442 = scmp.ne.s32.totalorder %s434, %s436
      %p443 = scmp.eq.s32.totalorder %s43, 1
      %p444 = por %p442, %p443
      %p445 = scmp.ne.s32.totalorder %s436, %s437
      %p446 = scmp.eq.s32.totalorder %s43, 0
      %p447 = por %p445, %p446
      %p448 = scmp.ne.s32.totalorder %s436, %s437
      %p449 = scmp.eq.s32.totalorder %s44, 1
      %p450 = por %p448, %p449
      %p452 = scmp.ne.s32.totalorder %s437, %s451
      %p453 = scmp.eq.s32.totalorder %s44, 0
      %p454 = por %p452, %p453
      %s456 = sadd.s32 %s455, 1
      %p459 = scmp.eq.s32.totalorder %s38, 1
      %p460 = scmp.ne.s32.totalorder %s455, %s457
      %p461 = scmp.eq.s32.totalorder %s38, 0
      %p462 = por %p460, %p461
      %p463 = scmp.ne.s32.totalorder %s455, %s457
      %p464 = scmp.eq.s32.totalorder %s43, 1
      %p465 = por %p463, %p464
      %p466 = scmp.ne.s32.totalorder %s457, %s458
      %p467 = scmp.eq.s32.totalorder %s43, 0
      %p468 = por %p466, %p467
      %p469 = scmp.ne.s32.totalorder %s457, %s458
      %p470 = scmp.eq.s32.totalorder %s44, 1
      %p471 = por %p469, %p470
      %p473 = scmp.ne.s32.totalorder %s458, %s472
      %p474 = scmp.eq.s32.totalorder %s44, 0
      %p475 = por %p473, %p474
      %s477 = sadd.s32 %s476, 1
      %p480 = scmp.eq.s32.totalorder %s38, 1
      %p481 = scmp.ne.s32.totalorder %s476, %s478
      %p482 = scmp.eq.s32.totalorder %s38, 0
      %p483 = por %p481, %p482
      %p484 = scmp.ne.s32.totalorder %s476, %s478
      %p485 = scmp.eq.s32.totalorder %s43, 1
      %p486 = por %p484, %p485
      %p487 = scmp.ne.s32.totalorder %s478, %s479
      %p488 = scmp.eq.s32.totalorder %s43, 0
      %p489 = por %p487, %p488
      %p490 = scmp.ne.s32.totalorder %s478, %s479
      %p491 = scmp.eq.s32.totalorder %s44, 1
      %p492 = por %p490, %p491
      %p494 = scmp.ne.s32.totalorder %s479, %s493
      %p495 = scmp.eq.s32.totalorder %s44, 0
      %p496 = por %p494, %p495
      %s498 = sadd.s32 %s497, 1
      %p501 = scmp.eq.s32.totalorder %s38, 1
      %p502 = scmp.ne.s32.totalorder %s497, %s499
      %p503 = scmp.eq.s32.totalorder %s38, 0
      %p504 = por %p502, %p503
      %p505 = scmp.ne.s32.totalorder %s497, %s499
      %p506 = scmp.eq.s32.totalorder %s43, 1
      %p507 = por %p505, %p506
      %p508 = scmp.ne.s32.totalorder %s499, %s500
      %p509 = scmp.eq.s32.totalorder %s43, 0
      %p510 = por %p508, %p509
      %p511 = scmp.ne.s32.totalorder %s499, %s500
      %p512 = scmp.eq.s32.totalorder %s44, 1
      %p513 = por %p511, %p512
      %p515 = scmp.ne.s32.totalorder %s500, %s514
      %p516 = scmp.eq.s32.totalorder %s44, 0
      %p517 = por %p515, %p516
      %s519 = sadd.s32 %s518, 1
      %p522 = scmp.eq.s32.totalorder %s38, 1
      %p523 = scmp.ne.s32.totalorder %s518, %s520
      %p524 = scmp.eq.s32.totalorder %s38, 0
      %p525 = por %p523, %p524
      %p526 = scmp.ne.s32.totalorder %s518, %s520
      %p527 = scmp.eq.s32.totalorder %s43, 1
      %p528 = por %p526, %p527
      %p529 = scmp.ne.s32.totalorder %s520, %s521
      %p530 = scmp.eq.s32.totalorder %s43, 0
      %p531 = por %p529, %p530
      %p532 = scmp.ne.s32.totalorder %s520, %s521
      %p533 = scmp.eq.s32.totalorder %s44, 1
      %p534 = por %p532, %p533
      %p536 = scmp.ne.s32.totalorder %s521, %s535
      %p537 = scmp.eq.s32.totalorder %s44, 0
      %p538 = por %p536, %p537
      %s540 = sadd.s32 %s539, 1
      %p543 = scmp.eq.s32.totalorder %s38, 1
      %p544 = scmp.ne.s32.totalorder %s539, %s541
      %p545 = scmp.eq.s32.totalorder %s38, 0
      %p546 = por %p544, %p545
      %p547 = scmp.ne.s32.totalorder %s539, %s541
      %p548 = scmp.eq.s32.totalorder %s43, 1
      %p549 = por %p547, %p548
      %p550 = scmp.ne.s32.totalorder %s541, %s542
      %p551 = scmp.eq.s32.totalorder %s43, 0
      %p552 = por %p550, %p551
      %p553 = scmp.ne.s32.totalorder %s541, %s542
      %p554 = scmp.eq.s32.totalorder %s44, 1
      %p555 = por %p553, %p554
      %p557 = scmp.ne.s32.totalorder %s542, %s556
      %p558 = scmp.eq.s32.totalorder %s44, 0
      %p559 = por %p557, %p558
      %s561 = sadd.s32 %s560, 1
      %p564 = scmp.eq.s32.totalorder %s38, 1
      %p565 = scmp.ne.s32.totalorder %s560, %s562
      %p566 = scmp.eq.s32.totalorder %s38, 0
      %p567 = por %p565, %p566
      %p568 = scmp.ne.s32.totalorder %s560, %s562
      %p569 = scmp.eq.s32.totalorder %s43, 1
      %p570 = por %p568, %p569
      %p571 = scmp.ne.s32.totalorder %s562, %s563
      %p572 = scmp.eq.s32.totalorder %s43, 0
      %p573 = por %p571, %p572
      %p574 = scmp.ne.s32.totalorder %s562, %s563
      %p575 = scmp.eq.s32.totalorder %s44, 1
      %p576 = por %p574, %p575
      %p578 = scmp.ne.s32.totalorder %s563, %s577
      %p579 = scmp.eq.s32.totalorder %s44, 0
      %p580 = por %p578, %p579
      %s582 = sadd.s32 %s581, 1
      %p585 = scmp.eq.s32.totalorder %s38, 1
      %p586 = scmp.ne.s32.totalorder %s581, %s583
      %p587 = scmp.eq.s32.totalorder %s38, 0
      %p588 = por %p586, %p587
      %p589 = scmp.ne.s32.totalorder %s581, %s583
      %p590 = scmp.eq.s32.totalorder %s43, 1
      %p591 = por %p589, %p590
      %p592 = scmp.ne.s32.totalorder %s583, %s584
      %p593 = scmp.eq.s32.totalorder %s43, 0
      %p594 = por %p592, %p593
      %p595 = scmp.ne.s32.totalorder %s583, %s584
      %p596 = scmp.eq.s32.totalorder %s44, 1
      %p597 = por %p595, %p596
      %p599 = scmp.ne.s32.totalorder %s584, %s598
      %p600 = scmp.eq.s32.totalorder %s44, 0
      %p601 = por %p599, %p600
      %s603 = sadd.s32 %s602, 1
      %p606 = scmp.eq.s32.totalorder %s38, 1
      %p607 = scmp.ne.s32.totalorder %s602, %s604
      %p608 = scmp.eq.s32.totalorder %s38, 0
      %p609 = por %p607, %p608
      %p610 = scmp.ne.s32.totalorder %s602, %s604
      %p611 = scmp.eq.s32.totalorder %s43, 1
      %p612 = por %p610, %p611
      %p613 = scmp.ne.s32.totalorder %s604, %s605
      %p614 = scmp.eq.s32.totalorder %s43, 0
      %p615 = por %p613, %p614
      %p616 = scmp.ne.s32.totalorder %s604, %s605
      %p617 = scmp.eq.s32.totalorder %s44, 1
      %p618 = por %p616, %p617
      %p620 = scmp.ne.s32.totalorder %s605, %s619
      %p621 = scmp.eq.s32.totalorder %s44, 0
      %p622 = por %p620, %p621
      %s623 = ssub.s32 %s38, %s45
      %p624 = scmp.eq.s32.totalorder %s623, 0
      %s626 = sadd.s32 %s625, 1
      %s627 = scalar_select %p624, %s625, %s626
      %p630 = pneg %p624
      %p631 = scmp.eq.s32.totalorder %s38, 1
      %p632 = por %p630, %p631
      %p633 = scmp.ne.s32.totalorder %s625, %s628
      %p634 = scmp.eq.s32.totalorder %s38, 0
      %p635 = por %p633, %p634
      %p636 = scmp.ne.s32.totalorder %s625, %s628
      %p637 = scmp.eq.s32.totalorder %s43, 1
      %p638 = por %p636, %p637
      %p639 = scmp.ne.s32.totalorder %s628, %s629
      %p640 = scmp.eq.s32.totalorder %s43, 0
      %p641 = por %p639, %p640
      %p642 = scmp.ne.s32.totalorder %s628, %s629
      %p643 = scmp.eq.s32.totalorder %s44, 1
      %p644 = por %p642, %p643
      %p646 = scmp.ne.s32.totalorder %s629, %s645
      %p647 = scmp.eq.s32.totalorder %s44, 0
      %p648 = por %p646, %p647
      %s649 = ssub.s32 %s38, %s45
      %p650 = scmp.eq.s32.totalorder %s649, 0
      %s652 = sadd.s32 %s651, 1
      %s653 = scalar_select %p650, %s651, %s652
      %p656 = pneg %p650
      %p657 = scmp.eq.s32.totalorder %s38, 1
      %p658 = por %p656, %p657
      %p659 = scmp.ne.s32.totalorder %s651, %s654
      %p660 = scmp.eq.s32.totalorder %s38, 0
      %p661 = por %p659, %p660
      %p662 = scmp.ne.s32.totalorder %s651, %s654
      %p663 = scmp.eq.s32.totalorder %s43, 1
      %p664 = por %p662, %p663
      %p665 = scmp.ne.s32.totalorder %s654, %s655
      %p666 = scmp.eq.s32.totalorder %s43, 0
      %p667 = por %p665, %p666
      %p668 = scmp.ne.s32.totalorder %s654, %s655
      %p669 = scmp.eq.s32.totalorder %s44, 1
      %p670 = por %p668, %p669
      %p672 = scmp.ne.s32.totalorder %s655, %s671
      %p673 = scmp.eq.s32.totalorder %s44, 0
      %p674 = por %p672, %p673
      %p675 = scmp.le.s32.totalorder 1, %s38
      %p676 = scmp.lt.s32.totalorder %s38, 3
      %p677 = pnand %p675, %p676
      %p678 = pneg %p677
      // Predicated region
      $region9: #{cnn_autoencoder_forward.1} parent=5 // pred_check
        _
      $region10: #{cnn_autoencoder_forward.1} parent=5 // pred_check_branch
        %680 = sbr.rel (%p677) target = $region12
      $region11: #{cnn_autoencoder_forward.1} parent=5 // pred_region
        %s681 = ssub.s32 %s38, 1
        // Predicated region
        $region13: #{cnn_autoencoder_forward.1} parent=11 // pred_check
          %p682 = pneg %p111
        $region14: #{cnn_autoencoder_forward.1} parent=11 // pred_check_branch
          %684 = sbr.rel (%p682) target = $region16
        $region15: #{cnn_autoencoder_forward.1} parent=11 // pred_region
          _
        $region16: #{cnn_autoencoder_forward.1} parent=11 // pred_fallthru
          _
        // Predicated region
        $region17: #{cnn_autoencoder_forward.1} parent=11 // pred_check
          %p685 = pneg %p132
        $region18: #{cnn_autoencoder_forward.1} parent=11 // pred_check_branch
          %687 = sbr.rel (%p685) target = $region20
        $region19: #{cnn_autoencoder_forward.1} parent=11 // pred_region
          _
        $region20: #{cnn_autoencoder_forward.1} parent=11 // pred_fallthru
          _
        // Predicated region
        $region21: #{cnn_autoencoder_forward.1} parent=11 // pred_check
          %p688 = pneg %p153
        $region22: #{cnn_autoencoder_forward.1} parent=11 // pred_check_branch
          %690 = sbr.rel (%p688) target = $region24
        $region23: #{cnn_autoencoder_forward.1} parent=11 // pred_region
          _
        $region24: #{cnn_autoencoder_forward.1} parent=11 // pred_fallthru
          _
        // Predicated region
        $region25: #{cnn_autoencoder_forward.1} parent=11 // pred_check
          %p691 = pneg %p174
        $region26: #{cnn_autoencoder_forward.1} parent=11 // pred_check_branch
          %693 = sbr.rel (%p691) target = $region28
        $region27: #{cnn_autoencoder_forward.1} parent=11 // pred_region
          _
        $region28: #{cnn_autoencoder_forward.1} parent=11 // pred_fallthru
          _
        // Predicated region
        $region29: #{cnn_autoencoder_forward.1} parent=11 // pred_check
          %p694 = pneg %p195
        $region30: #{cnn_autoencoder_forward.1} parent=11 // pred_check_branch
          %696 = sbr.rel (%p694) target = $region32
        $region31: #{cnn_autoencoder_forward.1} parent=11 // pred_region
          _
        $region32: #{cnn_autoencoder_forward.1} parent=11 // pred_fallthru
          _
        // Predicated region
        $region33: #{cnn_autoencoder_forward.1} parent=11 // pred_check
          %p697 = pneg %p216
        $region34: #{cnn_autoencoder_forward.1} parent=11 // pred_check_branch
          %699 = sbr.rel (%p697) target = $region36
        $region35: #{cnn_autoencoder_forward.1} parent=11 // pred_region
          _
        $region36: #{cnn_autoencoder_forward.1} parent=11 // pred_fallthru
          _
        // Predicated region
        $region37: #{cnn_autoencoder_forward.1} parent=11 // pred_check
          %p700 = pneg %p237
        $region38: #{cnn_autoencoder_forward.1} parent=11 // pred_check_branch
          %702 = sbr.rel (%p700) target = $region40
        $region39: #{cnn_autoencoder_forward.1} parent=11 // pred_region
          _
        $region40: #{cnn_autoencoder_forward.1} parent=11 // pred_fallthru
          _
        // Predicated region
        $region41: #{cnn_autoencoder_forward.1} parent=11 // pred_check
          %p703 = pneg %p258
        $region42: #{cnn_autoencoder_forward.1} parent=11 // pred_check_branch
          %705 = sbr.rel (%p703) target = $region44
        $region43: #{cnn_autoencoder_forward.1} parent=11 // pred_region
          _
        $region44: #{cnn_autoencoder_forward.1} parent=11 // pred_fallthru
          _
        // Predicated region
        $region45: #{cnn_autoencoder_forward.1} parent=11 // pred_check
          %p706 = pneg %p279
        $region46: #{cnn_autoencoder_forward.1} parent=11 // pred_check_branch
          %708 = sbr.rel (%p706) target = $region48
        $region47: #{cnn_autoencoder_forward.1} parent=11 // pred_region
          _
        $region48: #{cnn_autoencoder_forward.1} parent=11 // pred_fallthru
          _
        // Predicated region
        $region49: #{cnn_autoencoder_forward.1} parent=11 // pred_check
          %p709 = pneg %p300
        $region50: #{cnn_autoencoder_forward.1} parent=11 // pred_check_branch
          %711 = sbr.rel (%p709) target = $region52
        $region51: #{cnn_autoencoder_forward.1} parent=11 // pred_region
          _
        $region52: #{cnn_autoencoder_forward.1} parent=11 // pred_fallthru
          _
        // Predicated region
        $region53: #{cnn_autoencoder_forward.1} parent=11 // pred_check
          %p712 = pneg %p321
        $region54: #{cnn_autoencoder_forward.1} parent=11 // pred_check_branch
          %714 = sbr.rel (%p712) target = $region56
        $region55: #{cnn_autoencoder_forward.1} parent=11 // pred_region
          _
        $region56: #{cnn_autoencoder_forward.1} parent=11 // pred_fallthru
          _
        // Predicated region
        $region57: #{cnn_autoencoder_forward.1} parent=11 // pred_check
          %p715 = pneg %p342
        $region58: #{cnn_autoencoder_forward.1} parent=11 // pred_check_branch
          %717 = sbr.rel (%p715) target = $region60
        $region59: #{cnn_autoencoder_forward.1} parent=11 // pred_region
          _
        $region60: #{cnn_autoencoder_forward.1} parent=11 // pred_fallthru
          _
        // Predicated region
        $region61: #{cnn_autoencoder_forward.1} parent=11 // pred_check
          %p718 = pneg %p363
        $region62: #{cnn_autoencoder_forward.1} parent=11 // pred_check_branch
          %720 = sbr.rel (%p718) target = $region64
        $region63: #{cnn_autoencoder_forward.1} parent=11 // pred_region
          _
        $region64: #{cnn_autoencoder_forward.1} parent=11 // pred_fallthru
          _
        // Predicated region
        $region65: #{cnn_autoencoder_forward.1} parent=11 // pred_check
          %p721 = pneg %p384
        $region66: #{cnn_autoencoder_forward.1} parent=11 // pred_check_branch
          %723 = sbr.rel (%p721) target = $region68
        $region67: #{cnn_autoencoder_forward.1} parent=11 // pred_region
          _
        $region68: #{cnn_autoencoder_forward.1} parent=11 // pred_fallthru
          _
        // Predicated region
        $region69: #{cnn_autoencoder_forward.1} parent=11 // pred_check
          %p724 = pneg %p405
        $region70: #{cnn_autoencoder_forward.1} parent=11 // pred_check_branch
          %726 = sbr.rel (%p724) target = $region72
        $region71: #{cnn_autoencoder_forward.1} parent=11 // pred_region
          _
        $region72: #{cnn_autoencoder_forward.1} parent=11 // pred_fallthru
          _
        // Predicated region
        $region73: #{cnn_autoencoder_forward.1} parent=11 // pred_check
          %p727 = pneg %p426
        $region74: #{cnn_autoencoder_forward.1} parent=11 // pred_check_branch
          %729 = sbr.rel (%p727) target = $region76
        $region75: #{cnn_autoencoder_forward.1} parent=11 // pred_region
          _
        $region76: #{cnn_autoencoder_forward.1} parent=11 // pred_fallthru
          _
        // Predicated region
        $region77: #{cnn_autoencoder_forward.1} parent=11 // pred_check
          %p730 = pneg %p447
        $region78: #{cnn_autoencoder_forward.1} parent=11 // pred_check_branch
          %732 = sbr.rel (%p730) target = $region80
        $region79: #{cnn_autoencoder_forward.1} parent=11 // pred_region
          _
        $region80: #{cnn_autoencoder_forward.1} parent=11 // pred_fallthru
          _
        // Predicated region
        $region81: #{cnn_autoencoder_forward.1} parent=11 // pred_check
          %p733 = pneg %p468
        $region82: #{cnn_autoencoder_forward.1} parent=11 // pred_check_branch
          %735 = sbr.rel (%p733) target = $region84
        $region83: #{cnn_autoencoder_forward.1} parent=11 // pred_region
          _
        $region84: #{cnn_autoencoder_forward.1} parent=11 // pred_fallthru
          _
        // Predicated region
        $region85: #{cnn_autoencoder_forward.1} parent=11 // pred_check
          %p736 = pneg %p489
        $region86: #{cnn_autoencoder_forward.1} parent=11 // pred_check_branch
          %738 = sbr.rel (%p736) target = $region88
        $region87: #{cnn_autoencoder_forward.1} parent=11 // pred_region
          _
        $region88: #{cnn_autoencoder_forward.1} parent=11 // pred_fallthru
          _
        // Predicated region
        $region89: #{cnn_autoencoder_forward.1} parent=11 // pred_check
          %p739 = pneg %p510
        $region90: #{cnn_autoencoder_forward.1} parent=11 // pred_check_branch
          %741 = sbr.rel (%p739) target = $region92
        $region91: #{cnn_autoencoder_forward.1} parent=11 // pred_region
          _
        $region92: #{cnn_autoencoder_forward.1} parent=11 // pred_fallthru
          _
        // Predicated region
        $region93: #{cnn_autoencoder_forward.1} parent=11 // pred_check
          %p742 = pneg %p531
        $region94: #{cnn_autoencoder_forward.1} parent=11 // pred_check_branch
          %744 = sbr.rel (%p742) target = $region96
        $region95: #{cnn_autoencoder_forward.1} parent=11 // pred_region
          _
        $region96: #{cnn_autoencoder_forward.1} parent=11 // pred_fallthru
          _
        // Predicated region
        $region97: #{cnn_autoencoder_forward.1} parent=11 // pred_check
          %p745 = pneg %p552
        $region98: #{cnn_autoencoder_forward.1} parent=11 // pred_check_branch
          %747 = sbr.rel (%p745) target = $region100
        $region99: #{cnn_autoencoder_forward.1} parent=11 // pred_region
          _
        $region100: #{cnn_autoencoder_forward.1} parent=11 // pred_fallthru
          _
        // Predicated region
        $region101: #{cnn_autoencoder_forward.1} parent=11 // pred_check
          %p748 = pneg %p573
        $region102: #{cnn_autoencoder_forward.1} parent=11 // pred_check_branch
          %750 = sbr.rel (%p748) target = $region104
        $region103: #{cnn_autoencoder_forward.1} parent=11 // pred_region
          _
        $region104: #{cnn_autoencoder_forward.1} parent=11 // pred_fallthru
          _
        // Predicated region
        $region105: #{cnn_autoencoder_forward.1} parent=11 // pred_check
          %p751 = pneg %p594
        $region106: #{cnn_autoencoder_forward.1} parent=11 // pred_check_branch
          %753 = sbr.rel (%p751) target = $region108
        $region107: #{cnn_autoencoder_forward.1} parent=11 // pred_region
          _
        $region108: #{cnn_autoencoder_forward.1} parent=11 // pred_fallthru
          _
        // Predicated region
        $region109: #{cnn_autoencoder_forward.1} parent=11 // pred_check
          %p754 = pneg %p615
        $region110: #{cnn_autoencoder_forward.1} parent=11 // pred_check_branch
          %756 = sbr.rel (%p754) target = $region112
        $region111: #{cnn_autoencoder_forward.1} parent=11 // pred_region
          _
        $region112: #{cnn_autoencoder_forward.1} parent=11 // pred_fallthru
          _
      $region12: #{cnn_autoencoder_forward.1} parent=5 // pred_fallthru
        _
      %p757 = scmp.lt.s32.totalorder %s38, 2
      // Predicated region
      $region113: #{cnn_autoencoder_forward.1} parent=5 // pred_check
        %p758 = pneg %p757
      $region114: #{cnn_autoencoder_forward.1} parent=5 // pred_check_branch
        %760 = sbr.rel (%p758) target = $region116
      $region115: #{cnn_autoencoder_forward.1} parent=5 // pred_region
        // Predicated region
        $region117: #{cnn_autoencoder_forward.1} parent=115 // pred_check
          %p761 = pneg %p58
        $region118: #{cnn_autoencoder_forward.1} parent=115 // pred_check_branch
          %763 = sbr.rel (%p761) target = $region120
        $region119: #{cnn_autoencoder_forward.1} parent=115 // pred_region
          %s764 = smul.u32 2, %s38
          %p765 = scmp.lt.s32.totalorder %s764, 3
          %s766 = scalar_select %p765, %s764, 3
          %s767 = smul.addr %s766, 8
          %s768 = scalar_lea.vmem %s0, %s767
          %s769 = smul.u32 2, %s38
        $region120: #{cnn_autoencoder_forward.1} parent=115 // pred_fallthru
          _
        // Predicated region
        $region121: #{cnn_autoencoder_forward.1} parent=115 // pred_check
          %p770 = pneg %p84
        $region122: #{cnn_autoencoder_forward.1} parent=115 // pred_check_branch
          %772 = sbr.rel (%p770) target = $region124
        $region123: #{cnn_autoencoder_forward.1} parent=115 // pred_region
          %s773 = smul.u32 2, %s38
          %p774 = scmp.lt.s32.totalorder %s773, 3
          %s775 = scalar_select %p774, %s773, 3
          %s776 = smul.addr %s775, 8
          %s777 = scalar_lea.vmem %s1, %s776
          %s778 = smul.u32 2, %s38
        $region124: #{cnn_autoencoder_forward.1} parent=115 // pred_fallthru
          _
      $region116: #{cnn_autoencoder_forward.1} parent=5 // pred_fallthru
        _
      %p779 = scmp.le.s32.totalorder 1, %s38
      %p780 = scmp.lt.s32.totalorder %s38, 3
      %p781 = pnand %p779, %p780
      %p782 = pneg %p781
      // Predicated region
      $region125: #{cnn_autoencoder_forward.1} parent=5 // pred_check
        _
      $region126: #{cnn_autoencoder_forward.1} parent=5 // pred_check_branch
        %784 = sbr.rel (%p781) target = $region128
      $region127: #{cnn_autoencoder_forward.1} parent=5 // pred_region
        %s785 = ssub.s32 %s38, 1
        %s786 = smul.u32 2, %s43
        %p787 = scmp.lt.s32.totalorder %s786, 3
        %s788 = scalar_select %p787, %s786, 3
        %s789 = smul.addr %s788, 8
        %s790 = scalar_lea.vmem %s0, %s789
        %p791 = pneg %p64
        %p792 = pneg %p61
        %s793 = smul.u32 2, %s43
        %p794 = scmp.lt.s32.totalorder %s793, 3
        %s795 = scalar_select %p794, %s793, 3
        %s796 = smul.addr %s795, 8
        %s797 = scalar_lea.vmem %s1, %s796
        %p798 = pneg %p90
        %p799 = pneg %p87
        %p800 = pneg %p111
        %p801 = pneg %p108
        %p802 = pneg %p132
        %p803 = pneg %p129
        %p804 = pneg %p153
        %p805 = pneg %p150
        %p806 = pneg %p174
        %p807 = pneg %p171
        %p808 = pneg %p195
        %p809 = pneg %p192
        %p810 = pneg %p216
        %p811 = pneg %p213
        %p812 = pneg %p237
        %p813 = pneg %p234
        %p814 = pneg %p258
        %p815 = pneg %p255
        %p816 = pneg %p279
        %p817 = pneg %p276
        %p818 = pneg %p300
        %p819 = pneg %p297
        %p820 = pneg %p321
        %p821 = pneg %p318
        %p822 = pneg %p342
        %p823 = pneg %p339
        %p824 = pneg %p363
        %p825 = pneg %p360
        %p826 = pneg %p384
        %p827 = pneg %p381
        %p828 = pneg %p405
        %p829 = pneg %p402
        %p830 = pneg %p426
        %p831 = pneg %p423
        %p832 = pneg %p447
        %p833 = pneg %p444
        %p834 = pneg %p468
        %p835 = pneg %p465
        %p836 = pneg %p489
        %p837 = pneg %p486
        %p838 = pneg %p510
        %p839 = pneg %p507
        %p840 = pneg %p531
        %p841 = pneg %p528
        %p842 = pneg %p552
        %p843 = pneg %p549
        %p844 = pneg %p573
        %p845 = pneg %p570
        %p846 = pneg %p594
        %p847 = pneg %p591
        %p848 = pneg %p615
        %p849 = pneg %p612
        %p850 = pneg %p641
        %p851 = pneg %p638
        %s852 = smul.u32 2, %s43
        %p853 = scmp.lt.s32.totalorder %s852, 3
        %s854 = scalar_select %p853, %s852, 3
        %s855 = smul.addr %s854, 4
        %s856 = scalar_lea.vmem %s27, %s855
        %p857 = pneg %p667
        %p858 = pneg %p664
        %s859 = sand.u32 %s654, 1
        %s860 = scalar_lea.sflag [#allocation3], %s859
        %s861 = sand.u32 %s654, 1
        %s862 = scalar_lea.vmem [#allocation2], %s861
        %s863 = smul.u32 2, %s43
        %p864 = scmp.lt.s32.totalorder %s863, 3
        %s865 = scalar_select %p864, %s863, 3
        %s866 = smul.addr %s865, 8
        %s867 = scalar_lea.vmem %s0, %s866
        %s868 = smul.u32 2, %s43
        %s869 = smul.u32 2, %s43
        %p870 = scmp.lt.s32.totalorder %s869, 3
        %s871 = scalar_select %p870, %s869, 3
        %s872 = smul.addr %s871, 8
        %s873 = scalar_lea.vmem %s1, %s872
        %s874 = smul.u32 2, %s43
        %s875 = smul.u32 2, %s43
        %p876 = scmp.lt.s32.totalorder %s875, 3
        %s877 = scalar_select %p876, %s875, 3
        %s878 = smul.addr %s877, 4
        %s879 = scalar_lea.vmem %s27, %s878
        %s880 = smul.u32 2, %s43
        %v882 = vld [vmem:[%s867] sm:$0xff]
        %v883 = vld [vmem:[%s867 + $0x8] sm:$0xff]
        %v884 = vld [vmem:[%s873] sm:$0xff]
        %v885 = vld [vmem:[%s873 + $0x8] sm:$0xff]
        %v886 = vmul.f32 %v884, 0.1
        %v887 = vmul.f32 %v885, 0.1
        %v888 = vadd.f32 %v882, %v886
        %v889 = vadd.f32 %v883, %v887
        %v890 = vld [vmem:[%s4] sm:$0xff]
        %v891 = vld [vmem:[%s4 + $0x8] sm:$0xff]
        %v892 = vld [vmem:[%s4 + $0x10] sm:$0x1]
        %v893 = vld [vmem:[%s4 + $0x18] sm:$0x1]
        %894 = vrot.lane.b32.xlu0 %v888, 17
        %v895 = vpop.permute.xlu0 %894
        %896 = vrot.lane.b32.xlu0 %v889, 17
        %v897 = vpop.permute.xlu0 %896
        %v898 = vlaneseq
        %v899 = vand.u32 %v898, 127
        %vm900 = vcmp.lt.s32.totalorder %v899, 17
        %v901 = vsel %vm900, %v895, %v897
        %v902 = vsel %vm900, %v897, %v895
        %v903 = vperm.slane %v890, 0
        %v904 = vperm.slane %v891, 0
        %v905 = vmul.f32 %v902, %v903
        %v906 = vmul.f32 %v901, %v904
        %907 = vrot.lane.b32.xlu0 %v888, 16
        %v908 = vpop.permute.xlu0 %907
        %909 = vrot.lane.b32.xlu0 %v889, 16
        %v910 = vpop.permute.xlu0 %909
        %vm911 = vcmp.lt.s32.totalorder %v899, 16
        %v912 = vsel %vm911, %v908, %v910
        %v913 = vsel %vm911, %v910, %v908
        %v914 = vperm.slane %v890, 1
        %v915 = vperm.slane %v891, 1
        %v916 = vmul.f32 %v913, %v914
        %v917 = vmul.f32 %v912, %v915
        %918 = vrot.lane.b32.xlu0 %v888, 15
        %v919 = vpop.permute.xlu0 %918
        %920 = vrot.lane.b32.xlu0 %v889, 15
        %v921 = vpop.permute.xlu0 %920
        %vm922 = vcmp.lt.s32.totalorder %v899, 15
        %v923 = vsel %vm922, %v919, %v921
        %v924 = vsel %vm922, %v921, %v919
        %v925 = vperm.slane %v890, 2
        %v926 = vperm.slane %v891, 2
        %v927 = vmul.f32 %v924, %v925
        %v928 = vmul.f32 %v923, %v926
        %929 = vrot.lane.b32.xlu0 %v888, 1
        %v930 = vpop.permute.xlu0 %929
        %931 = vrot.lane.b32.xlu0 %v889, 1
        %v932 = vpop.permute.xlu0 %931
        %vm933 = vcmp.lt.s32.totalorder %v899, 1
        %v934 = vsel %vm933, %v930, %v932
        %v935 = vsel %vm933, %v932, %v930
        %v936 = vperm.slane %v890, 3
        %v937 = vperm.slane %v891, 3
        %v938 = vmul.f32 %v935, %v936
        %v939 = vmul.f32 %v934, %v937
        %940 = vrot.lane.b32.xlu0 %v888, 127
        %v941 = vpop.permute.xlu0 %940
        %942 = vrot.lane.b32.xlu0 %v889, 127
        %v943 = vpop.permute.xlu0 %942
        %vm944 = vcmp.lt.s32.totalorder %v899, 127
        %v945 = vsel %vm944, %v941, %v943
        %v946 = vsel %vm944, %v943, %v941
        %v947 = vperm.slane %v890, 5
        %v948 = vperm.slane %v891, 5
        %v949 = vmul.f32 %v945, %v947
        %v950 = vmul.f32 %v946, %v948
        %951 = vrot.lane.b32.xlu0 %v888, 113
        %v952 = vpop.permute.xlu0 %951
        %953 = vrot.lane.b32.xlu0 %v889, 113
        %v954 = vpop.permute.xlu0 %953
        %vm955 = vcmp.lt.s32.totalorder %v899, 113
        %v956 = vsel %vm955, %v952, %v954
        %v957 = vsel %vm955, %v954, %v952
        %v958 = vperm.slane %v890, 6
        %v959 = vperm.slane %v891, 6
        %v960 = vmul.f32 %v956, %v958
        %v961 = vmul.f32 %v957, %v959
        %962 = vrot.lane.b32.xlu0 %v888, 112
        %v963 = vpop.permute.xlu0 %962
        %964 = vrot.lane.b32.xlu0 %v889, 112
        %v965 = vpop.permute.xlu0 %964
        %vm966 = vcmp.lt.s32.totalorder %v899, 112
        %v967 = vsel %vm966, %v963, %v965
        %v968 = vsel %vm966, %v965, %v963
        %v969 = vperm.slane %v890, 7
        %v970 = vperm.slane %v891, 7
        %v971 = vmul.f32 %v967, %v969
        %v972 = vmul.f32 %v968, %v970
        %973 = vrot.lane.b32.xlu0 %v888, 111
        %v974 = vpop.permute.xlu0 %973
        %975 = vrot.lane.b32.xlu0 %v889, 111
        %v976 = vpop.permute.xlu0 %975
        %vm977 = vcmp.lt.s32.totalorder %v899, 111
        %v978 = vsel %vm977, %v974, %v976
        %v979 = vsel %vm977, %v976, %v974
        %v980 = vperm.slane %v892, 0
        %v981 = vperm.slane %v893, 0
        %v982 = vmul.f32 %v978, %v980
        %v983 = vmul.f32 %v979, %v981
        %v984 = vpack.c.bf16 %v916, %v905
        %v985 = vpack.c.bf16 %v917, %v906
        %v986 = vpack.c.bf16 %v938, %v927
        %v987 = vpack.c.bf16 %v939, %v928
        %v988 = vpack.c.bf16 %v949, %v888
        %v989 = vpack.c.bf16 %v950, %v889
        %v990 = vpack.c.bf16 %v971, %v960
        %v991 = vpack.c.bf16 %v972, %v961
        %v992 = vpack.c.bf16 %v982, %v982
        %v993 = vpack.c.bf16 %v983, %v983
        %v994 = vld [vmem:[%s2] sm:$0xf]
        %v995 = vld [vmem:[%s3] sm:$0xff]
        %997 = vset.pattern.permute.xlu0 0
        %998 = vperm.xlu0 %997, %v995
        %v999 = vpop.permute.xlu0 %998
        %vm1001 = vcmask 588800
        %v1003 = vsel %vm1001, %v994, 0
        %vm1005 = vcmask 1043456
        %v1007 = vsel %vm1005, %v992, 0
        %v1010 = vsel %vm1005, %v993, 0
        %1012 = vmatpush.bf16.msra.mxu0 0
        %1013 = vmatpush.bf16.msra.mxu0 0
        %1014 = vmatpush.bf16.msra.mxu0 0
        %1015 = vmatpush.bf16.msra.mxu0 %v1007
        %1016 = vmatpush.bf16.msra.mxu0 %v990
        %1017 = vmatpush.bf16.msra.mxu0 %v988
        %1018 = vmatpush.bf16.msra.mxu0 %v986
        %1019 = vmatpush.bf16.msra.mxu0 %v984
        %1020 = vmatmul.bf16.gmra.mxu0 %v1003
        %v1021 = vpop.f32.mrf.mxu0
        %v1022 = vadd.f32 %v999, %v1021
        %v1023 = vpop.f32.mrf.mxu0
        %1024 = vdwg.mxu0
        %1025 = vmatpush.bf16.msra.mxu0 0
        %1026 = vmatpush.bf16.msra.mxu0 0
        %1027 = vmatpush.bf16.msra.mxu0 0
        %1028 = vmatpush.bf16.msra.mxu0 %v1010
        %1029 = vmatpush.bf16.msra.mxu0 %v991
        %1030 = vmatpush.bf16.msra.mxu0 %v989
        %1031 = vmatpush.bf16.msra.mxu0 %v987
        %1032 = vmatpush.bf16.msra.mxu0 %v985
        %1033 = vmatmul.bf16.gmra.mxu0 %v1003
        %v1034 = vpop.f32.mrf.mxu0
        %v1035 = vadd.f32 %v999, %v1034
        %v1036 = vpop.f32.mrf.mxu0
        %1037 = vdwg.mxu0
        %v1038 = vmax.f32 %v1022, 0.0
        %v1039 = vmax.f32 %v1035, 0.0
        %v1040 = vpack.c.bf16 %v1038, %v1038
        %v1041 = vpack.c.bf16 %v1039, %v1039
        %v1042 = vld [vmem:[%s5] sm:$0xf]
        %v1043 = vld [vmem:[%s5 + $0x4] sm:$0xf]
        %v1044 = vld [vmem:[%s5 + $0x8] sm:$0xf]
        %v1045 = vld [vmem:[%s5 + $0xc] sm:$0xf]
        %v1046 = vld [vmem:[%s5 + $0x10] sm:$0xf]
        %v1047 = vld [vmem:[%s5 + $0x14] sm:$0xf]
        %v1048 = vld [vmem:[%s5 + $0x18] sm:$0xf]
        %v1049 = vld [vmem:[%s5 + $0x1c] sm:$0xf]
        %v1050 = vld [vmem:[%s5 + $0x20] sm:$0xf]
        %v1051 = vld [vmem:[%s5 + $0x24] sm:$0xf]
        %v1052 = vld [vmem:[%s5 + $0x28] sm:$0xf]
        %v1053 = vld [vmem:[%s5 + $0x2c] sm:$0xf]
        %v1054 = vld [vmem:[%s5 + $0x30] sm:$0xf]
        %v1055 = vld [vmem:[%s5 + $0x34] sm:$0xf]
        %v1056 = vld [vmem:[%s5 + $0x38] sm:$0xf]
        %v1057 = vld [vmem:[%s5 + $0x3c] sm:$0xf]
        %v1058 = vld [vmem:[%s5 + $0x40] sm:$0xf]
        %v1059 = vld [vmem:[%s5 + $0x44] sm:$0xf]
        %v1060 = vld [vmem:[%s5 + $0x48] sm:$0xf]
        %v1061 = vld [vmem:[%s5 + $0x4c] sm:$0xf]
        %v1062 = vld [vmem:[%s5 + $0x50] sm:$0xf]
        %v1063 = vld [vmem:[%s5 + $0x54] sm:$0xf]
        %v1064 = vld [vmem:[%s5 + $0x58] sm:$0xf]
        %v1065 = vld [vmem:[%s5 + $0x5c] sm:$0xf]
        %v1066 = vld [vmem:[%s5 + $0x60] sm:$0xf]
        %v1067 = vld [vmem:[%s5 + $0x64] sm:$0xf]
        %v1068 = vld [vmem:[%s5 + $0x68] sm:$0xf]
        %v1069 = vld [vmem:[%s5 + $0x6c] sm:$0xf]
        %v1070 = vld [vmem:[%s5 + $0x70] sm:$0xf]
        %v1071 = vld [vmem:[%s5 + $0x74] sm:$0xf]
        %v1072 = vld [vmem:[%s5 + $0x78] sm:$0xf]
        %v1073 = vld [vmem:[%s5 + $0x7c] sm:$0xf]
        %v1106 = vunpack.c.l.b16 %v1042
        %v1107 = vunpack.c.l.b16 %v1043
        %v1108 = vunpack.c.l.b16 %v1044
        %v1109 = vunpack.c.l.b16 %v1045
        %v1110 = vunpack.c.l.b16 %v1046
        %v1111 = vunpack.c.l.b16 %v1047
        %v1112 = vunpack.c.l.b16 %v1048
        %v1113 = vunpack.c.l.b16 %v1049
        %v1114 = vunpack.c.l.b16 %v1050
        %v1115 = vunpack.c.l.b16 %v1051
        %v1116 = vunpack.c.l.b16 %v1052
        %v1117 = vunpack.c.l.b16 %v1053
        %v1118 = vunpack.c.l.b16 %v1054
        %v1119 = vunpack.c.l.b16 %v1055
        %v1120 = vunpack.c.l.b16 %v1056
        %v1121 = vunpack.c.l.b16 %v1057
        %v1122 = vunpack.c.l.b16 %v1058
        %v1123 = vunpack.c.l.b16 %v1059
        %v1124 = vunpack.c.l.b16 %v1060
        %v1125 = vunpack.c.l.b16 %v1061
        %v1126 = vunpack.c.l.b16 %v1062
        %v1127 = vunpack.c.l.b16 %v1063
        %v1128 = vunpack.c.l.b16 %v1064
        %v1129 = vunpack.c.l.b16 %v1065
        %v1130 = vunpack.c.l.b16 %v1066
        %v1131 = vunpack.c.l.b16 %v1067
        %v1132 = vunpack.c.l.b16 %v1068
        %v1133 = vunpack.c.l.b16 %v1069
        %v1134 = vunpack.c.l.b16 %v1070
        %v1135 = vunpack.c.l.b16 %v1071
        %v1136 = vunpack.c.l.b16 %v1072
        %v1137 = vunpack.c.l.b16 %v1073
        %v1138 = vpack.c.b16 %v1107, %v1106
        %v1139 = vpack.c.b16 %v1109, %v1108
        %v1140 = vpack.c.b16 %v1111, %v1110
        %v1141 = vpack.c.b16 %v1113, %v1112
        %v1142 = vpack.c.b16 %v1115, %v1114
        %v1143 = vpack.c.b16 %v1117, %v1116
        %v1144 = vpack.c.b16 %v1119, %v1118
        %v1145 = vpack.c.b16 %v1121, %v1120
        %v1146 = vpack.c.b16 %v1123, %v1122
        %v1147 = vpack.c.b16 %v1125, %v1124
        %v1148 = vpack.c.b16 %v1127, %v1126
        %v1149 = vpack.c.b16 %v1129, %v1128
        %v1150 = vpack.c.b16 %v1131, %v1130
        %v1151 = vpack.c.b16 %v1133, %v1132
        %v1152 = vpack.c.b16 %v1135, %v1134
        %v1153 = vpack.c.b16 %v1137, %v1136
        %1170 = vmatpush.bf16.msra.mxu0 %v1145
        %1171 = vmatpush.bf16.msra.mxu0 %v1144
        %1172 = vmatpush.bf16.msra.mxu0 %v1143
        %1173 = vmatpush.bf16.msra.mxu0 %v1142
        %1174 = vmatpush.bf16.msra.mxu0 %v1141
        %1175 = vmatpush.bf16.msra.mxu0 %v1140
        %1176 = vmatpush.bf16.msra.mxu0 %v1139
        %1177 = vmatpush.bf16.msra.mxu0 %v1138
        %1178 = vmatmul.bf16.gmra.mxu0 %v1040
        %v1179 = vpop.f32.mrf.mxu0
        %v1180 = vadd.f32 0.0, %v1179
        %v1181 = vpop.f32.mrf.mxu0
        %1182 = vdwg.mxu0
        %1183 = vmatpush.bf16.msra.mxu0 %v1153
        %1184 = vmatpush.bf16.msra.mxu0 %v1152
        %1185 = vmatpush.bf16.msra.mxu0 %v1151
        %1186 = vmatpush.bf16.msra.mxu0 %v1150
        %1187 = vmatpush.bf16.msra.mxu0 %v1149
        %1188 = vmatpush.bf16.msra.mxu0 %v1148
        %1189 = vmatpush.bf16.msra.mxu0 %v1147
        %1190 = vmatpush.bf16.msra.mxu0 %v1146
        %1191 = vmatmul.bf16.gmra.mxu0 %v1041
        %v1192 = vpop.f32.mrf.mxu0
        %v1193 = vadd.f32 %v1180, %v1192
        %v1194 = vpop.f32.mrf.mxu0
        %1195 = vdwg.mxu0
        %v1196 = vld [vmem:[%s8] sm:$0xff]
        %v1197 = vld [vmem:[%s8 + $0x8] sm:$0x1]
        %vm1198 = vcmask 1048064
        %1199 = vrot.lane.b32.xlu0 %v1193, 64
        %v1200 = vpop.permute.xlu0 %1199
        %v1201 = vsel %vm1198, %v1200, %v1193
        %1202 = vrot.lane.b32.xlu0 %v1201, 64
        %v1203 = vpop.permute.xlu0 %1202
        %v1204 = vsel %vm1198, %v1203, %v1193
        %v1205 = vperm.slane %v1196, 0
        %1207 = vrot.lane.b32.xlu0 %v1205, 55
        %v1208 = vpop.permute.xlu0 %1207
        %v1210 = vmul.f32 %v1204, %v1208
        %v1211 = vperm.slane %v1196, 1
        %1213 = vrot.lane.b32.xlu0 %v1211, 56
        %v1214 = vpop.permute.xlu0 %1213
        %v1216 = vmul.f32 %v1204, %v1214
        %v1217 = vperm.slane %v1196, 2
        %1219 = vrot.lane.b32.xlu0 %v1217, 57
        %v1220 = vpop.permute.xlu0 %1219
        %v1222 = vmul.f32 %v1204, %v1220
        %v1223 = vperm.slane %v1196, 3
        %1225 = vrot.lane.b32.xlu0 %v1223, 63
        %v1226 = vpop.permute.xlu0 %1225
        %v1228 = vmul.f32 %v1204, %v1226
        %v1229 = vperm.slane %v1196, 5
        %1231 = vrot.lane.b32.xlu0 %v1229, 1
        %v1232 = vpop.permute.xlu0 %1231
        %v1234 = vmul.f32 %v1204, %v1232
        %v1235 = vperm.slane %v1196, 6
        %1237 = vrot.lane.b32.xlu0 %v1235, 7
        %v1238 = vpop.permute.xlu0 %1237
        %v1240 = vmul.f32 %v1204, %v1238
        %v1241 = vperm.slane %v1196, 7
        %1243 = vrot.lane.b32.xlu0 %v1241, 8
        %v1244 = vpop.permute.xlu0 %1243
        %v1246 = vmul.f32 %v1204, %v1244
        %v1247 = vperm.slane %v1197, 0
        %1249 = vrot.lane.b32.xlu0 %v1247, 9
        %v1250 = vpop.permute.xlu0 %1249
        %v1252 = vmul.f32 %v1204, %v1250
        %1254 = vrot.lane.b32.xlu0 %v1216, 127
        %v1255 = vpop.permute.xlu0 %1254
        %1258 = vrot.lane.b32.xlu0 %v1222, 126
        %v1259 = vpop.permute.xlu0 %1258
        %1262 = vrot.lane.b32.xlu0 %v1228, 120
        %v1263 = vpop.permute.xlu0 %1262
        %1266 = vrot.lane.b32.xlu0 %v1193, 55
        %v1267 = vpop.permute.xlu0 %1266
        %1270 = vrot.lane.b32.xlu0 %v1234, 54
        %v1271 = vpop.permute.xlu0 %1270
        %1274 = vrot.lane.b32.xlu0 %v1240, 48
        %v1275 = vpop.permute.xlu0 %1274
        %1278 = vrot.lane.b32.xlu0 %v1246, 47
        %v1279 = vpop.permute.xlu0 %1278
        %1282 = vrot.lane.b32.xlu0 %v1252, 46
        %v1283 = vpop.permute.xlu0 %1282
        %v1285 = vpack.c.bf16 %v1255, %v1210
        %v1286 = vpack.c.bf16 %v1263, %v1259
        %v1287 = vpack.c.bf16 %v1271, %v1267
        %v1288 = vpack.c.bf16 %v1279, %v1275
        %v1289 = vpack.c.bf16 %v1283, %v1283
        %v1290 = vld [vmem:[%s6] sm:$0xf]
        %v1291 = vld [vmem:[%s6 + $0x4] sm:$0xf]
        %v1292 = vld [vmem:[%s7] sm:$0xff]
        %v1293 = vld [vmem:[%s7 + $0x8] sm:$0xff]
        %1295 = vset.pattern.permute.xlu0 0
        %1296 = vperm.xlu0 %1295, %v1292
        %v1297 = vpop.permute.xlu0 %1296
        %1300 = vset.pattern.permute.xlu0 0
        %1301 = vperm.xlu0 %1300, %v1293
        %v1302 = vpop.permute.xlu0 %1301
        %v1306 = vunpack.c.l.b16 %v1290
        %v1307 = vunpack.c.l.b16 %v1291
        %v1308 = vpack.c.b16 %v1307, %v1306
        %1314 = vrot.lane.b32.xlu0 %v1285, 73
        %v1315 = vpop.permute.xlu0 %1314
        %1316 = vrot.lane.b32.xlu0 %v1286, 73
        %v1317 = vpop.permute.xlu0 %1316
        %1318 = vrot.lane.b32.xlu0 %v1287, 73
        %v1319 = vpop.permute.xlu0 %1318
        %1320 = vrot.lane.b32.xlu0 %v1288, 73
        %v1321 = vpop.permute.xlu0 %1320
        %1322 = vrot.lane.b32.xlu0 %v1289, 73
        %v1323 = vpop.permute.xlu0 %1322
        %v1329 = vsel %vm1001, %v1308, 0
        %v1332 = vsel %vm1005, %v1323, 0
        %1334 = vmatpush.bf16.msra.mxu0 0
        %1335 = vmatpush.bf16.msra.mxu0 0
        %1336 = vmatpush.bf16.msra.mxu0 0
        %1337 = vmatpush.bf16.msra.mxu0 %v1332
        %1338 = vmatpush.bf16.msra.mxu0 %v1321
        %1339 = vmatpush.bf16.msra.mxu0 %v1319
        %1340 = vmatpush.bf16.msra.mxu0 %v1317
        %1341 = vmatpush.bf16.msra.mxu0 %v1315
        %1342 = vmatmul.bf16.gmra.mxu0 %v1329
        %v1343 = vpop.f32.mrf.mxu0
        %v1344 = vadd.f32 %v1297, %v1343
        %v1345 = vpop.f32.mrf.mxu0
        %v1346 = vadd.f32 %v1302, %v1345
        %1347 = vdwg.mxu0
        %v1348 = vmax.f32 %v1344, 0.0
        %v1349 = vmax.f32 %v1346, 0.0
        %v1350 = vpack.c.bf16 %v1349, %v1348
        %v1351 = vld [vmem:[%s9] sm:$0xf]
        %v1352 = vld [vmem:[%s9 + $0x4] sm:$0xf]
        %v1353 = vld [vmem:[%s9 + $0x8] sm:$0xf]
        %v1354 = vld [vmem:[%s9 + $0xc] sm:$0xf]
        %v1355 = vld [vmem:[%s9 + $0x10] sm:$0xf]
        %v1356 = vld [vmem:[%s9 + $0x14] sm:$0xf]
        %v1357 = vld [vmem:[%s9 + $0x18] sm:$0xf]
        %v1358 = vld [vmem:[%s9 + $0x1c] sm:$0xf]
        %v1367 = vunpack.c.l.b16 %v1351
        %v1368 = vunpack.c.l.b16 %v1352
        %v1369 = vunpack.c.l.b16 %v1353
        %v1370 = vunpack.c.l.b16 %v1354
        %v1371 = vunpack.c.l.b16 %v1355
        %v1372 = vunpack.c.l.b16 %v1356
        %v1373 = vunpack.c.l.b16 %v1357
        %v1374 = vunpack.c.l.b16 %v1358
        %v1375 = vpack.c.b16 %v1368, %v1367
        %v1376 = vpack.c.b16 %v1370, %v1369
        %v1377 = vpack.c.b16 %v1372, %v1371
        %v1378 = vpack.c.b16 %v1374, %v1373
        %vm1383 = vcmask 523264
        %v1385 = vsel %vm1383, %v1350, 0
        %1387 = vmatpush.bf16.msra.mxu0 0
        %1388 = vmatpush.bf16.msra.mxu0 0
        %1389 = vmatpush.bf16.msra.mxu0 0
        %1390 = vmatpush.bf16.msra.mxu0 0
        %1391 = vmatpush.bf16.msra.mxu0 %v1378
        %1392 = vmatpush.bf16.msra.mxu0 %v1377
        %1393 = vmatpush.bf16.msra.mxu0 %v1376
        %1394 = vmatpush.bf16.msra.mxu0 %v1375
        %1395 = vmatmul.bf16.gmra.mxu0 %v1385
        %v1396 = vpop.f32.mrf.mxu0
        %v1397 = vadd.f32 0.0, %v1396
        %v1398 = vpop.f32.mrf.mxu0
        %v1399 = vadd.f32 0.0, %v1398
        %1400 = vdwg.mxu0
        %v1401 = vld [vmem:[%s11] sm:$0xff]
        %v1402 = vld [vmem:[%s11 + $0x8] sm:$0xff]
        %v1403 = vld [vmem:[%s11 + $0x10] sm:$0xff]
        %v1404 = vld [vmem:[%s11 + $0x18] sm:$0xff]
        %v1405 = vld [vmem:[%s10] sm:$0xff]
        %v1406 = vld [vmem:[%s10 + $0x8] sm:$0xff]
        %v1407 = vld [vmem:[%s10 + $0x10] sm:$0xff]
        %v1408 = vld [vmem:[%s10 + $0x18] sm:$0xff]
        %vm1409 = vcmask 130048
        %v1411 = vsel %vm1409, %v1397, 0
        %v1414 = vsel %vm1409, %v1399, 0
        %1416 = vmatpush.msra.mxu0 0.0
        %1417 = vmatpush.msra.mxu0 0.0
        %1418 = vmatpush.msra.mxu0 0.0
        %1419 = vmatpush.msra.mxu0 0.0
        %1420 = vmatpush.msra.mxu0 0.0
        %1421 = vmatpush.msra.mxu0 0.0
        %1422 = vmatpush.msra.mxu0 0.0
        %1423 = vmatpush.msra.mxu0 0.0
        %1424 = vmatpush.msra.mxu0 0.0
        %1425 = vmatpush.msra.mxu0 0.0
        %1426 = vmatpush.msra.mxu0 0.0
        %1427 = vmatpush.msra.mxu0 0.0
        %1428 = vmatpush.msra.mxu0 0.0
        %1429 = vmatpush.msra.mxu0 0.0
        %1430 = vmatpush.msra.mxu0 %v1407
        %1431 = vmatpush.msra.mxu0 %v1405
        %1432 = vmatmul.f32.gmra.mxu0 %v1411
        %v1433 = vpop.f32.mrf.mxu0
        %v1434 = vadd.f32 0.0, %v1433
        %1435 = vmatmul.f32.gmra.mxu0 %v1414
        %v1436 = vpop.f32.mrf.mxu0
        %v1437 = vadd.f32 0.0, %v1436
        %1438 = vdwg.mxu0
        %1439 = vmatpush.msra.mxu0 0.0
        %1440 = vmatpush.msra.mxu0 0.0
        %1441 = vmatpush.msra.mxu0 0.0
        %1442 = vmatpush.msra.mxu0 0.0
        %1443 = vmatpush.msra.mxu0 0.0
        %1444 = vmatpush.msra.mxu0 0.0
        %1445 = vmatpush.msra.mxu0 0.0
        %1446 = vmatpush.msra.mxu0 0.0
        %1447 = vmatpush.msra.mxu0 0.0
        %1448 = vmatpush.msra.mxu0 0.0
        %1449 = vmatpush.msra.mxu0 0.0
        %1450 = vmatpush.msra.mxu0 0.0
        %1451 = vmatpush.msra.mxu0 0.0
        %1452 = vmatpush.msra.mxu0 0.0
        %1453 = vmatpush.msra.mxu0 %v1408
        %1454 = vmatpush.msra.mxu0 %v1406
        %1455 = vmatmul.f32.gmra.mxu0 %v1411
        %v1456 = vpop.f32.mrf.mxu0
        %v1457 = vadd.f32 0.0, %v1456
        %1458 = vmatmul.f32.gmra.mxu0 %v1414
        %v1459 = vpop.f32.mrf.mxu0
        %v1460 = vadd.f32 0.0, %v1459
        %1461 = vdwg.mxu0
        %v1462 = vmul.f32 %v1434, %v1401
        %v1463 = vmul.f32 %v1457, %v1402
        %v1464 = vmul.f32 %v1437, %v1403
        %v1465 = vmul.f32 %v1460, %v1404
        %v1466 = vadd.f32 %v1462, %v1464
        %v1467 = vrot.slane %v1466, 4
        %v1468 = vadd.f32 %v1466, %v1467
        %v1469 = vrot.slane %v1468, 2
        %v1470 = vadd.f32 %v1468, %v1469
        %v1471 = vrot.slane %v1470, 1
        %v1472 = vadd.f32 %v1470, %v1471
        %v1473 = vadd.f32 %v1463, %v1465
        %v1474 = vrot.slane %v1473, 4
        %v1475 = vadd.f32 %v1473, %v1474
        %v1476 = vrot.slane %v1475, 2
        %v1477 = vadd.f32 %v1475, %v1476
        %v1478 = vrot.slane %v1477, 1
        %v1479 = vadd.f32 %v1477, %v1478
        %v1480 = vld [vmem:[%s13] sm:$0xff]
        %v1481 = vld [vmem:[%s13 + $0x8] sm:$0xff]
        %v1482 = vld [vmem:[%s13 + $0x10] sm:$0xff]
        %v1483 = vld [vmem:[%s13 + $0x18] sm:$0xff]
        %v1484 = vld [vmem:[%s13 + $0x20] sm:$0xff]
        %v1485 = vld [vmem:[%s13 + $0x28] sm:$0xff]
        %v1486 = vld [vmem:[%s13 + $0x30] sm:$0xff]
        %v1487 = vld [vmem:[%s13 + $0x38] sm:$0xff]
        %v1488 = vld [vmem:[%s13 + $0x40] sm:$0xff]
        %v1489 = vld [vmem:[%s13 + $0x48] sm:$0xff]
        %v1490 = vld [vmem:[%s13 + $0x50] sm:$0xff]
        %v1491 = vld [vmem:[%s13 + $0x58] sm:$0xff]
        %v1492 = vld [vmem:[%s13 + $0x60] sm:$0xff]
        %v1493 = vld [vmem:[%s13 + $0x68] sm:$0xff]
        %v1494 = vld [vmem:[%s13 + $0x70] sm:$0xff]
        %v1495 = vld [vmem:[%s13 + $0x78] sm:$0xff]
        %v1496 = vld [vmem:[%s13 + $0x80] sm:$0xff]
        %v1497 = vld [vmem:[%s13 + $0x88] sm:$0xff]
        %v1498 = vld [vmem:[%s13 + $0x90] sm:$0xff]
        %v1499 = vld [vmem:[%s13 + $0x98] sm:$0xff]
        %v1500 = vld [vmem:[%s13 + $0xa0] sm:$0xff]
        %v1501 = vld [vmem:[%s13 + $0xa8] sm:$0xff]
        %v1502 = vld [vmem:[%s13 + $0xb0] sm:$0xff]
        %v1503 = vld [vmem:[%s13 + $0xb8] sm:$0xff]
        %v1504 = vld [vmem:[%s13 + $0xc0] sm:$0xff]
        %v1505 = vld [vmem:[%s13 + $0xc8] sm:$0xff]
        %v1506 = vld [vmem:[%s13 + $0xd0] sm:$0xff]
        %v1507 = vld [vmem:[%s13 + $0xd8] sm:$0xff]
        %v1508 = vld [vmem:[%s13 + $0xe0] sm:$0xff]
        %v1509 = vld [vmem:[%s13 + $0xe8] sm:$0xff]
        %v1510 = vld [vmem:[%s13 + $0xf0] sm:$0xff]
        %v1511 = vld [vmem:[%s13 + $0xf8] sm:$0xff]
        %v1512 = vld [vmem:[%s14] sm:$0x1]
        %1513 = vmatpush.msra.mxu0 %v1495
        %1514 = vmatpush.msra.mxu0 %v1494
        %1515 = vmatpush.msra.mxu0 %v1493
        %1516 = vmatpush.msra.mxu0 %v1492
        %1517 = vmatpush.msra.mxu0 %v1491
        %1518 = vmatpush.msra.mxu0 %v1490
        %1519 = vmatpush.msra.mxu0 %v1489
        %1520 = vmatpush.msra.mxu0 %v1488
        %1521 = vmatpush.msra.mxu0 %v1487
        %1522 = vmatpush.msra.mxu0 %v1486
        %1523 = vmatpush.msra.mxu0 %v1485
        %1524 = vmatpush.msra.mxu0 %v1484
        %1525 = vmatpush.msra.mxu0 %v1483
        %1526 = vmatpush.msra.mxu0 %v1482
        %1527 = vmatpush.msra.mxu0 %v1481
        %1528 = vmatpush.msra.mxu0 %v1480
        %1529 = vmatmul.f32.gmra.mxu0 %v1472
        %v1530 = vpop.f32.mrf.mxu0
        %v1531 = vadd.f32 %v1512, %v1530
        %1532 = vdwg.mxu0
        %1533 = vmatpush.msra.mxu0 %v1511
        %1534 = vmatpush.msra.mxu0 %v1510
        %1535 = vmatpush.msra.mxu0 %v1509
        %1536 = vmatpush.msra.mxu0 %v1508
        %1537 = vmatpush.msra.mxu0 %v1507
        %1538 = vmatpush.msra.mxu0 %v1506
        %1539 = vmatpush.msra.mxu0 %v1505
        %1540 = vmatpush.msra.mxu0 %v1504
        %1541 = vmatpush.msra.mxu0 %v1503
        %1542 = vmatpush.msra.mxu0 %v1502
        %1543 = vmatpush.msra.mxu0 %v1501
        %1544 = vmatpush.msra.mxu0 %v1500
        %1545 = vmatpush.msra.mxu0 %v1499
        %1546 = vmatpush.msra.mxu0 %v1498
        %1547 = vmatpush.msra.mxu0 %v1497
        %1548 = vmatpush.msra.mxu0 %v1496
        %1549 = vmatmul.f32.gmra.mxu0 %v1479
        %v1550 = vpop.f32.mrf.mxu0
        %v1551 = vadd.f32 %v1531, %v1550
        %1552 = vdwg.mxu0
        %v1553 = vmax.f32 %v1551, 0.0
        %v1554 = vld [vmem:[%s15] sm:$0xff]
        %v1555 = vld [vmem:[%s15 + $0x8] sm:$0xff]
        %v1556 = vld [vmem:[%s15 + $0x10] sm:$0xff]
        %v1557 = vld [vmem:[%s15 + $0x18] sm:$0xff]
        %v1558 = vld [vmem:[%s15 + $0x20] sm:$0xff]
        %v1559 = vld [vmem:[%s15 + $0x28] sm:$0xff]
        %v1560 = vld [vmem:[%s15 + $0x30] sm:$0xff]
        %v1561 = vld [vmem:[%s15 + $0x38] sm:$0xff]
        %v1562 = vld [vmem:[%s16] sm:$0x1]
        %v1564 = vsel %vm1383, %v1553, 0
        %1566 = vmatpush.msra.mxu0 0.0
        %1567 = vmatpush.msra.mxu0 0.0
        %1568 = vmatpush.msra.mxu0 0.0
        %1569 = vmatpush.msra.mxu0 0.0
        %1570 = vmatpush.msra.mxu0 0.0
        %1571 = vmatpush.msra.mxu0 0.0
        %1572 = vmatpush.msra.mxu0 0.0
        %1573 = vmatpush.msra.mxu0 0.0
        %1574 = vmatpush.msra.mxu0 %v1561
        %1575 = vmatpush.msra.mxu0 %v1560
        %1576 = vmatpush.msra.mxu0 %v1559
        %1577 = vmatpush.msra.mxu0 %v1558
        %1578 = vmatpush.msra.mxu0 %v1557
        %1579 = vmatpush.msra.mxu0 %v1556
        %1580 = vmatpush.msra.mxu0 %v1555
        %1581 = vmatpush.msra.mxu0 %v1554
        %1582 = vmatmul.f32.gmra.mxu0 %v1564
        %v1583 = vpop.f32.mrf.mxu0
        %v1584 = vadd.f32 %v1562, %v1583
        %1585 = vdwg.mxu0
        %v1586 = vmax.f32 %v1584, 0.0
        %vm1587 = vcmask 253952
        %1588 = vst.msk [vmem:[%s862] sm:$0x1] %vm1587, %v1586
        %v1589 = vld [vmem:[%s17] sm:$0xff]
        %v1590 = vld [vmem:[%s17 + $0x8] sm:$0xff]
        %v1591 = vld [vmem:[%s17 + $0x10] sm:$0xff]
        %v1592 = vld [vmem:[%s17 + $0x18] sm:$0xff]
        %v1593 = vld [vmem:[%s18] sm:$0x1]
        %vm1594 = vcmask 261120
        %v1596 = vsel %vm1594, %v1586, 0
        %1598 = vmatpush.msra.mxu0 0.0
        %1599 = vmatpush.msra.mxu0 0.0
        %1600 = vmatpush.msra.mxu0 0.0
        %1601 = vmatpush.msra.mxu0 0.0
        %1602 = vmatpush.msra.mxu0 0.0
        %1603 = vmatpush.msra.mxu0 0.0
        %1604 = vmatpush.msra.mxu0 0.0
        %1605 = vmatpush.msra.mxu0 0.0
        %1606 = vmatpush.msra.mxu0 0.0
        %1607 = vmatpush.msra.mxu0 0.0
        %1608 = vmatpush.msra.mxu0 0.0
        %1609 = vmatpush.msra.mxu0 0.0
        %1610 = vmatpush.msra.mxu0 %v1592
        %1611 = vmatpush.msra.mxu0 %v1591
        %1612 = vmatpush.msra.mxu0 %v1590
        %1613 = vmatpush.msra.mxu0 %v1589
        %1614 = vmatmul.f32.gmra.mxu0 %v1596
        %v1615 = vpop.f32.mrf.mxu0
        %v1616 = vadd.f32 %v1593, %v1615
        %1617 = vdwg.mxu0
        %v1618 = vmax.f32 %v1616, 0.0
        %v1619 = vld [vmem:[%s19] sm:$0xff]
        %v1620 = vld [vmem:[%s19 + $0x8] sm:$0xff]
        %v1621 = vld [vmem:[%s19 + $0x10] sm:$0xff]
        %v1622 = vld [vmem:[%s19 + $0x18] sm:$0xff]
        %v1623 = vld [vmem:[%s19 + $0x20] sm:$0xff]
        %v1624 = vld [vmem:[%s19 + $0x28] sm:$0xff]
        %v1625 = vld [vmem:[%s19 + $0x30] sm:$0xff]
        %v1626 = vld [vmem:[%s19 + $0x38] sm:$0xff]
        %v1627 = vld [vmem:[%s19 + $0x40] sm:$0xff]
        %v1628 = vld [vmem:[%s19 + $0x48] sm:$0xff]
        %v1629 = vld [vmem:[%s19 + $0x50] sm:$0xff]
        %v1630 = vld [vmem:[%s19 + $0x58] sm:$0xff]
        %v1631 = vld [vmem:[%s19 + $0x60] sm:$0xff]
        %v1632 = vld [vmem:[%s19 + $0x68] sm:$0xff]
        %v1633 = vld [vmem:[%s19 + $0x70] sm:$0xff]
        %v1634 = vld [vmem:[%s19 + $0x78] sm:$0xff]
        %v1635 = vld [vmem:[%s20] sm:$0x3]
        %v1637 = vperm.slane %v1635, 0
        %v1638 = vperm.slane %v1635, 1
        %v1642 = vsel %vm1383, %v1618, 0
        %1644 = vmatpush.msra.mxu0 0.0
        %1645 = vmatpush.msra.mxu0 0.0
        %1646 = vmatpush.msra.mxu0 0.0
        %1647 = vmatpush.msra.mxu0 0.0
        %1648 = vmatpush.msra.mxu0 0.0
        %1649 = vmatpush.msra.mxu0 0.0
        %1650 = vmatpush.msra.mxu0 0.0
        %1651 = vmatpush.msra.mxu0 0.0
        %1652 = vmatpush.msra.mxu0 %v1633
        %1653 = vmatpush.msra.mxu0 %v1631
        %1654 = vmatpush.msra.mxu0 %v1629
        %1655 = vmatpush.msra.mxu0 %v1627
        %1656 = vmatpush.msra.mxu0 %v1625
        %1657 = vmatpush.msra.mxu0 %v1623
        %1658 = vmatpush.msra.mxu0 %v1621
        %1659 = vmatpush.msra.mxu0 %v1619
        %1660 = vmatmul.f32.gmra.mxu0 %v1642
        %v1661 = vpop.f32.mrf.mxu0
        %v1662 = vadd.f32 %v1637, %v1661
        %1663 = vdwg.mxu0
        %1664 = vmatpush.msra.mxu0 0.0
        %1665 = vmatpush.msra.mxu0 0.0
        %1666 = vmatpush.msra.mxu0 0.0
        %1667 = vmatpush.msra.mxu0 0.0
        %1668 = vmatpush.msra.mxu0 0.0
        %1669 = vmatpush.msra.mxu0 0.0
        %1670 = vmatpush.msra.mxu0 0.0
        %1671 = vmatpush.msra.mxu0 0.0
        %1672 = vmatpush.msra.mxu0 %v1634
        %1673 = vmatpush.msra.mxu0 %v1632
        %1674 = vmatpush.msra.mxu0 %v1630
        %1675 = vmatpush.msra.mxu0 %v1628
        %1676 = vmatpush.msra.mxu0 %v1626
        %1677 = vmatpush.msra.mxu0 %v1624
        %1678 = vmatpush.msra.mxu0 %v1622
        %1679 = vmatpush.msra.mxu0 %v1620
        %1680 = vmatmul.f32.gmra.mxu0 %v1642
        %v1681 = vpop.f32.mrf.mxu0
        %v1682 = vadd.f32 %v1638, %v1681
        %1683 = vdwg.mxu0
        %v1684 = vmax.f32 %v1662, 0.0
        %v1685 = vmax.f32 %v1682, 0.0
        %v1686 = vperm.slane %v1684, 0
        %v1687 = vperm.slane %v1685, 0
        %v1688 = vmul.f32 %v1686, %v1401
        %v1689 = vmul.f32 %v1687, %v1402
        %v1690 = vmul.f32 %v1686, %v1403
        %v1691 = vmul.f32 %v1687, %v1404
        %v1692 = vld [vmem:[%s12] sm:$0xff]
        %v1693 = vld [vmem:[%s12 + $0x8] sm:$0xff]
        %v1694 = vld [vmem:[%s12 + $0x10] sm:$0xff]
        %v1695 = vld [vmem:[%s12 + $0x18] sm:$0xff]
        %v1696 = vld [vmem:[%s12 + $0x20] sm:$0xff]
        %v1697 = vld [vmem:[%s12 + $0x28] sm:$0xff]
        %v1698 = vld [vmem:[%s12 + $0x30] sm:$0xff]
        %v1699 = vld [vmem:[%s12 + $0x38] sm:$0xff]
        %v1700 = vld [vmem:[%s12 + $0x40] sm:$0xff]
        %v1701 = vld [vmem:[%s12 + $0x48] sm:$0xff]
        %v1702 = vld [vmem:[%s12 + $0x50] sm:$0xff]
        %v1703 = vld [vmem:[%s12 + $0x58] sm:$0xff]
        %v1704 = vld [vmem:[%s12 + $0x60] sm:$0xff]
        %v1705 = vld [vmem:[%s12 + $0x68] sm:$0xff]
        %v1706 = vld [vmem:[%s12 + $0x70] sm:$0xff]
        %v1707 = vld [vmem:[%s12 + $0x78] sm:$0xff]
        %v1708 = vld [vmem:[%s12 + $0x80] sm:$0xff]
        %v1709 = vld [vmem:[%s12 + $0x88] sm:$0xff]
        %v1710 = vld [vmem:[%s12 + $0x90] sm:$0xff]
        %v1711 = vld [vmem:[%s12 + $0x98] sm:$0xff]
        %v1712 = vld [vmem:[%s12 + $0xa0] sm:$0xff]
        %v1713 = vld [vmem:[%s12 + $0xa8] sm:$0xff]
        %v1714 = vld [vmem:[%s12 + $0xb0] sm:$0xff]
        %v1715 = vld [vmem:[%s12 + $0xb8] sm:$0xff]
        %v1716 = vld [vmem:[%s12 + $0xc0] sm:$0xff]
        %v1717 = vld [vmem:[%s12 + $0xc8] sm:$0xff]
        %v1718 = vld [vmem:[%s12 + $0xd0] sm:$0xff]
        %v1719 = vld [vmem:[%s12 + $0xd8] sm:$0xff]
        %v1720 = vld [vmem:[%s12 + $0xe0] sm:$0xff]
        %v1721 = vld [vmem:[%s12 + $0xe8] sm:$0xff]
        %v1722 = vld [vmem:[%s12 + $0xf0] sm:$0xff]
        %v1723 = vld [vmem:[%s12 + $0xf8] sm:$0xff]
        %1724 = vmatpush.msra.mxu0 %v1707
        %1725 = vmatpush.msra.mxu0 %v1706
        %1726 = vmatpush.msra.mxu0 %v1705
        %1727 = vmatpush.msra.mxu0 %v1704
        %1728 = vmatpush.msra.mxu0 %v1703
        %1729 = vmatpush.msra.mxu0 %v1702
        %1730 = vmatpush.msra.mxu0 %v1701
        %1731 = vmatpush.msra.mxu0 %v1700
        %1732 = vmatpush.msra.mxu0 %v1699
        %1733 = vmatpush.msra.mxu0 %v1698
        %1734 = vmatpush.msra.mxu0 %v1697
        %1735 = vmatpush.msra.mxu0 %v1696
        %1736 = vmatpush.msra.mxu0 %v1695
        %1737 = vmatpush.msra.mxu0 %v1694
        %1738 = vmatpush.msra.mxu0 %v1693
        %1739 = vmatpush.msra.mxu0 %v1692
        %1740 = vmatmul.f32.gmra.mxu0 %v1688
        %v1741 = vpop.f32.mrf.mxu0
        %v1742 = vadd.f32 0.0, %v1741
        %1743 = vmatmul.f32.gmra.mxu0 %v1690
        %v1744 = vpop.f32.mrf.mxu0
        %v1745 = vadd.f32 0.0, %v1744
        %1746 = vdwg.mxu0
        %1747 = vmatpush.msra.mxu0 %v1723
        %1748 = vmatpush.msra.mxu0 %v1722
        %1749 = vmatpush.msra.mxu0 %v1721
        %1750 = vmatpush.msra.mxu0 %v1720
        %1751 = vmatpush.msra.mxu0 %v1719
        %1752 = vmatpush.msra.mxu0 %v1718
        %1753 = vmatpush.msra.mxu0 %v1717
        %1754 = vmatpush.msra.mxu0 %v1716
        %1755 = vmatpush.msra.mxu0 %v1715
        %1756 = vmatpush.msra.mxu0 %v1714
        %1757 = vmatpush.msra.mxu0 %v1713
        %1758 = vmatpush.msra.mxu0 %v1712
        %1759 = vmatpush.msra.mxu0 %v1711
        %1760 = vmatpush.msra.mxu0 %v1710
        %1761 = vmatpush.msra.mxu0 %v1709
        %1762 = vmatpush.msra.mxu0 %v1708
        %1763 = vmatmul.f32.gmra.mxu0 %v1689
        %v1764 = vpop.f32.mrf.mxu0
        %v1765 = vadd.f32 %v1742, %v1764
        %1766 = vmatmul.f32.gmra.mxu0 %v1691
        %v1767 = vpop.f32.mrf.mxu0
        %v1768 = vadd.f32 %v1745, %v1767
        %1769 = vdwg.mxu0
        %v1770 = vpack.c.bf16 %v1768, %v1765
        %v1771 = vld [vmem:[%s21] sm:$0xf]
        %v1772 = vld [vmem:[%s21 + $0x4] sm:$0xf]
        %v1775 = vunpack.c.l.b16 %v1771
        %v1776 = vunpack.c.l.b16 %v1772
        %v1777 = vpack.c.b16 %v1776, %v1775
        %v1780 = vsel %vm1409, %v1770, 0
        %1782 = vmatpush.bf16.msra.mxu0 0
        %1783 = vmatpush.bf16.msra.mxu0 0
        %1784 = vmatpush.bf16.msra.mxu0 0
        %1785 = vmatpush.bf16.msra.mxu0 0
        %1786 = vmatpush.bf16.msra.mxu0 0
        %1787 = vmatpush.bf16.msra.mxu0 0
        %1788 = vmatpush.bf16.msra.mxu0 0
        %1789 = vmatpush.bf16.msra.mxu0 %v1777
        %1790 = vmatmul.bf16.gmra.mxu0 %v1780
        %v1791 = vpop.f32.mrf.mxu0
        %v1792 = vadd.f32 0.0, %v1791
        %v1793 = vpop.f32.mrf.mxu0
        %v1794 = vadd.f32 0.0, %v1793
        %1795 = vdwg.mxu0
        %v1796 = vld [vmem:[%s8] sm:$0xff]
        %v1797 = vld [vmem:[%s8 + $0x8] sm:$0x1]
        %1798 = vrot.lane.b32.xlu0 %v1792, 64
        %v1799 = vpop.permute.xlu0 %1798
        %v1800 = vsel %vm1198, %v1799, %v1792
        %1801 = vrot.lane.b32.xlu0 %v1794, 64
        %v1802 = vpop.permute.xlu0 %1801
        %v1803 = vsel %vm1198, %v1802, %v1794
        %1804 = vrot.lane.b32.xlu0 %v1800, 64
        %v1805 = vpop.permute.xlu0 %1804
        %1806 = vrot.lane.b32.xlu0 %v1803, 64
        %v1807 = vpop.permute.xlu0 %1806
        %v1808 = vsel %vm1198, %v1805, %v1792
        %v1809 = vsel %vm1198, %v1807, %v1794
        %v1810 = vperm.slane %v1796, 0
        %1812 = vrot.lane.b32.xlu0 %v1810, 55
        %v1813 = vpop.permute.xlu0 %1812
        %v1815 = vmul.f32 %v1808, %v1813
        %v1816 = vmul.f32 %v1809, %v1813
        %v1817 = vperm.slane %v1796, 1
        %1819 = vrot.lane.b32.xlu0 %v1817, 56
        %v1820 = vpop.permute.xlu0 %1819
        %v1822 = vmul.f32 %v1808, %v1820
        %v1823 = vmul.f32 %v1809, %v1820
        %v1824 = vperm.slane %v1796, 2
        %1826 = vrot.lane.b32.xlu0 %v1824, 57
        %v1827 = vpop.permute.xlu0 %1826
        %v1829 = vmul.f32 %v1808, %v1827
        %v1830 = vmul.f32 %v1809, %v1827
        %v1831 = vperm.slane %v1796, 3
        %1833 = vrot.lane.b32.xlu0 %v1831, 63
        %v1834 = vpop.permute.xlu0 %1833
        %v1836 = vmul.f32 %v1808, %v1834
        %v1837 = vmul.f32 %v1809, %v1834
        %v1838 = vperm.slane %v1796, 5
        %1840 = vrot.lane.b32.xlu0 %v1838, 1
        %v1841 = vpop.permute.xlu0 %1840
        %v1843 = vmul.f32 %v1808, %v1841
        %v1844 = vmul.f32 %v1809, %v1841
        %v1845 = vperm.slane %v1796, 6
        %1847 = vrot.lane.b32.xlu0 %v1845, 7
        %v1848 = vpop.permute.xlu0 %1847
        %v1850 = vmul.f32 %v1808, %v1848
        %v1851 = vmul.f32 %v1809, %v1848
        %v1852 = vperm.slane %v1796, 7
        %1854 = vrot.lane.b32.xlu0 %v1852, 8
        %v1855 = vpop.permute.xlu0 %1854
        %v1857 = vmul.f32 %v1808, %v1855
        %v1858 = vmul.f32 %v1809, %v1855
        %v1859 = vperm.slane %v1797, 0
        %1861 = vrot.lane.b32.xlu0 %v1859, 9
        %v1862 = vpop.permute.xlu0 %1861
        %v1864 = vmul.f32 %v1808, %v1862
        %v1865 = vmul.f32 %v1809, %v1862
        %1868 = vrot.lane.b32.xlu0 %v1822, 127
        %v1869 = vpop.permute.xlu0 %1868
        %1870 = vrot.lane.b32.xlu0 %v1823, 127
        %v1871 = vpop.permute.xlu0 %1870
        %1876 = vrot.lane.b32.xlu0 %v1829, 126
        %v1877 = vpop.permute.xlu0 %1876
        %1878 = vrot.lane.b32.xlu0 %v1830, 126
        %v1879 = vpop.permute.xlu0 %1878
        %1884 = vrot.lane.b32.xlu0 %v1836, 120
        %v1885 = vpop.permute.xlu0 %1884
        %1886 = vrot.lane.b32.xlu0 %v1837, 120
        %v1887 = vpop.permute.xlu0 %1886
        %1892 = vrot.lane.b32.xlu0 %v1792, 55
        %v1893 = vpop.permute.xlu0 %1892
        %1894 = vrot.lane.b32.xlu0 %v1794, 55
        %v1895 = vpop.permute.xlu0 %1894
        %1900 = vrot.lane.b32.xlu0 %v1843, 54
        %v1901 = vpop.permute.xlu0 %1900
        %1902 = vrot.lane.b32.xlu0 %v1844, 54
        %v1903 = vpop.permute.xlu0 %1902
        %1908 = vrot.lane.b32.xlu0 %v1850, 48
        %v1909 = vpop.permute.xlu0 %1908
        %1910 = vrot.lane.b32.xlu0 %v1851, 48
        %v1911 = vpop.permute.xlu0 %1910
        %1916 = vrot.lane.b32.xlu0 %v1857, 47
        %v1917 = vpop.permute.xlu0 %1916
        %1918 = vrot.lane.b32.xlu0 %v1858, 47
        %v1919 = vpop.permute.xlu0 %1918
        %1924 = vrot.lane.b32.xlu0 %v1864, 46
        %v1925 = vpop.permute.xlu0 %1924
        %1926 = vrot.lane.b32.xlu0 %v1865, 46
        %v1927 = vpop.permute.xlu0 %1926
        %v1930 = vpack.c.bf16 %v1816, %v1815
        %v1931 = vpack.c.bf16 %v1871, %v1869
        %v1932 = vpack.c.bf16 %v1879, %v1877
        %v1933 = vpack.c.bf16 %v1887, %v1885
        %v1934 = vpack.c.bf16 %v1895, %v1893
        %v1935 = vpack.c.bf16 %v1903, %v1901
        %v1936 = vpack.c.bf16 %v1911, %v1909
        %v1937 = vpack.c.bf16 %v1919, %v1917
        %v1938 = vpack.c.bf16 %v1927, %v1925
        %v1939 = vld [vmem:[%s22] sm:$0xff]
        %v1940 = vld [vmem:[%s23] sm:$0xff]
        %1942 = vset.pattern.permute.xlu0 0
        %1943 = vperm.xlu0 %1942, %v1940
        %v1944 = vpop.permute.xlu0 %1943
        %v1947 = vunpack.c.l.b16 %v1939
        %v1948 = vunpack.c.h.b16 %v1939
        %v1949 = vpack.c.b16 %v1947, %v1947
        %v1950 = vpack.c.b16 %v1948, %v1948
        %1961 = vrot.lane.b32.xlu0 %v1930, 73
        %v1962 = vpop.permute.xlu0 %1961
        %1963 = vrot.lane.b32.xlu0 %v1931, 73
        %v1964 = vpop.permute.xlu0 %1963
        %1965 = vrot.lane.b32.xlu0 %v1932, 73
        %v1966 = vpop.permute.xlu0 %1965
        %1967 = vrot.lane.b32.xlu0 %v1933, 73
        %v1968 = vpop.permute.xlu0 %1967
        %1969 = vrot.lane.b32.xlu0 %v1934, 73
        %v1970 = vpop.permute.xlu0 %1969
        %1971 = vrot.lane.b32.xlu0 %v1935, 73
        %v1972 = vpop.permute.xlu0 %1971
        %1973 = vrot.lane.b32.xlu0 %v1936, 73
        %v1974 = vpop.permute.xlu0 %1973
        %1975 = vrot.lane.b32.xlu0 %v1937, 73
        %v1976 = vpop.permute.xlu0 %1975
        %1977 = vrot.lane.b32.xlu0 %v1938, 73
        %v1978 = vpop.permute.xlu0 %1977
        %v1989 = vsel %vm1409, %v1950, 0
        %1991 = vmatpush.bf16.msra.mxu0 %v1976
        %1992 = vmatpush.bf16.msra.mxu0 %v1974
        %1993 = vmatpush.bf16.msra.mxu0 %v1972
        %1994 = vmatpush.bf16.msra.mxu0 %v1970
        %1995 = vmatpush.bf16.msra.mxu0 %v1968
        %1996 = vmatpush.bf16.msra.mxu0 %v1966
        %1997 = vmatpush.bf16.msra.mxu0 %v1964
        %1998 = vmatpush.bf16.msra.mxu0 %v1962
        %1999 = vmatmul.bf16.gmra.mxu0 %v1949
        %v2000 = vpop.f32.mrf.mxu0
        %v2001 = vadd.f32 %v1944, %v2000
        %v2002 = vpop.f32.mrf.mxu0
        %2003 = vdwg.mxu0
        %2004 = vmatpush.bf16.msra.mxu0 0
        %2005 = vmatpush.bf16.msra.mxu0 0
        %2006 = vmatpush.bf16.msra.mxu0 0
        %2007 = vmatpush.bf16.msra.mxu0 0
        %2008 = vmatpush.bf16.msra.mxu0 0
        %2009 = vmatpush.bf16.msra.mxu0 0
        %2010 = vmatpush.bf16.msra.mxu0 0
        %2011 = vmatpush.bf16.msra.mxu0 %v1978
        %2012 = vmatmul.bf16.gmra.mxu0 %v1989
        %v2013 = vpop.f32.mrf.mxu0
        %v2014 = vadd.f32 %v2001, %v2013
        %v2015 = vpop.f32.mrf.mxu0
        %2016 = vdwg.mxu0
        %v2017 = vmax.f32 %v2014, 0.0
        %v2018 = vpack.c.bf16 %v2017, %v2017
        %v2019 = vld [vmem:[%s24] sm:$0xff]
        %v2020 = vld [vmem:[%s24 + $0x8] sm:$0xff]
        %v2021 = vld [vmem:[%s24 + $0x10] sm:$0xff]
        %v2022 = vld [vmem:[%s24 + $0x18] sm:$0xff]
        %v2023 = vld [vmem:[%s24 + $0x20] sm:$0xff]
        %v2024 = vld [vmem:[%s24 + $0x28] sm:$0xff]
        %v2025 = vld [vmem:[%s24 + $0x30] sm:$0xff]
        %v2026 = vld [vmem:[%s24 + $0x38] sm:$0xff]
        %v2035 = vunpack.c.l.b16 %v2019
        %v2036 = vunpack.c.h.b16 %v2019
        %v2037 = vunpack.c.l.b16 %v2020
        %v2038 = vunpack.c.h.b16 %v2020
        %v2039 = vunpack.c.l.b16 %v2021
        %v2040 = vunpack.c.h.b16 %v2021
        %v2041 = vunpack.c.l.b16 %v2022
        %v2042 = vunpack.c.h.b16 %v2022
        %v2043 = vunpack.c.l.b16 %v2023
        %v2044 = vunpack.c.h.b16 %v2023
        %v2045 = vunpack.c.l.b16 %v2024
        %v2046 = vunpack.c.h.b16 %v2024
        %v2047 = vunpack.c.l.b16 %v2025
        %v2048 = vunpack.c.h.b16 %v2025
        %v2049 = vunpack.c.l.b16 %v2026
        %v2050 = vunpack.c.h.b16 %v2026
        %v2051 = vpack.c.b16 %v2037, %v2035
        %v2052 = vpack.c.b16 %v2038, %v2036
        %v2053 = vpack.c.b16 %v2041, %v2039
        %v2054 = vpack.c.b16 %v2042, %v2040
        %v2055 = vpack.c.b16 %v2045, %v2043
        %v2056 = vpack.c.b16 %v2046, %v2044
        %v2057 = vpack.c.b16 %v2049, %v2047
        %v2058 = vpack.c.b16 %v2050, %v2048
        %v2068 = vsel %vm1383, %v2018, 0
        %2070 = vmatpush.bf16.msra.mxu0 0
        %2071 = vmatpush.bf16.msra.mxu0 0
        %2072 = vmatpush.bf16.msra.mxu0 0
        %2073 = vmatpush.bf16.msra.mxu0 0
        %2074 = vmatpush.bf16.msra.mxu0 %v2057
        %2075 = vmatpush.bf16.msra.mxu0 %v2055
        %2076 = vmatpush.bf16.msra.mxu0 %v2053
        %2077 = vmatpush.bf16.msra.mxu0 %v2051
        %2078 = vmatmul.bf16.gmra.mxu0 %v2068
        %v2079 = vpop.f32.mrf.mxu0
        %v2080 = vadd.f32 0.0, %v2079
        %v2081 = vpop.f32.mrf.mxu0
        %2082 = vdwg.mxu0
        %2083 = vmatpush.bf16.msra.mxu0 0
        %2084 = vmatpush.bf16.msra.mxu0 0
        %2085 = vmatpush.bf16.msra.mxu0 0
        %2086 = vmatpush.bf16.msra.mxu0 0
        %2087 = vmatpush.bf16.msra.mxu0 %v2058
        %2088 = vmatpush.bf16.msra.mxu0 %v2056
        %2089 = vmatpush.bf16.msra.mxu0 %v2054
        %2090 = vmatpush.bf16.msra.mxu0 %v2052
        %2091 = vmatmul.bf16.gmra.mxu0 %v2068
        %v2092 = vpop.f32.mrf.mxu0
        %v2093 = vadd.f32 0.0, %v2092
        %v2094 = vpop.f32.mrf.mxu0
        %2095 = vdwg.mxu0
        %v2096 = vld [vmem:[%s4] sm:$0xff]
        %v2097 = vld [vmem:[%s4 + $0x8] sm:$0xff]
        %v2098 = vld [vmem:[%s4 + $0x10] sm:$0x1]
        %v2099 = vld [vmem:[%s4 + $0x18] sm:$0x1]
        %2100 = vrot.lane.b32.xlu0 %v2080, 17
        %v2101 = vpop.permute.xlu0 %2100
        %2102 = vrot.lane.b32.xlu0 %v2093, 17
        %v2103 = vpop.permute.xlu0 %2102
        %v2104 = vsel %vm900, %v2101, %v2103
        %v2105 = vsel %vm900, %v2103, %v2101
        %v2106 = vperm.slane %v2096, 0
        %v2107 = vperm.slane %v2097, 0
        %v2108 = vmul.f32 %v2105, %v2106
        %v2109 = vmul.f32 %v2104, %v2107
        %2110 = vrot.lane.b32.xlu0 %v2080, 16
        %v2111 = vpop.permute.xlu0 %2110
        %2112 = vrot.lane.b32.xlu0 %v2093, 16
        %v2113 = vpop.permute.xlu0 %2112
        %v2114 = vsel %vm911, %v2111, %v2113
        %v2115 = vsel %vm911, %v2113, %v2111
        %v2116 = vperm.slane %v2096, 1
        %v2117 = vperm.slane %v2097, 1
        %v2118 = vmul.f32 %v2115, %v2116
        %v2119 = vmul.f32 %v2114, %v2117
        %2120 = vrot.lane.b32.xlu0 %v2080, 15
        %v2121 = vpop.permute.xlu0 %2120
        %2122 = vrot.lane.b32.xlu0 %v2093, 15
        %v2123 = vpop.permute.xlu0 %2122
        %v2124 = vsel %vm922, %v2121, %v2123
        %v2125 = vsel %vm922, %v2123, %v2121
        %v2126 = vperm.slane %v2096, 2
        %v2127 = vperm.slane %v2097, 2
        %v2128 = vmul.f32 %v2125, %v2126
        %v2129 = vmul.f32 %v2124, %v2127
        %2130 = vrot.lane.b32.xlu0 %v2080, 1
        %v2131 = vpop.permute.xlu0 %2130
        %2132 = vrot.lane.b32.xlu0 %v2093, 1
        %v2133 = vpop.permute.xlu0 %2132
        %v2134 = vsel %vm933, %v2131, %v2133
        %v2135 = vsel %vm933, %v2133, %v2131
        %v2136 = vperm.slane %v2096, 3
        %v2137 = vperm.slane %v2097, 3
        %v2138 = vmul.f32 %v2135, %v2136
        %v2139 = vmul.f32 %v2134, %v2137
        %2140 = vrot.lane.b32.xlu0 %v2080, 127
        %v2141 = vpop.permute.xlu0 %2140
        %2142 = vrot.lane.b32.xlu0 %v2093, 127
        %v2143 = vpop.permute.xlu0 %2142
        %v2144 = vsel %vm944, %v2141, %v2143
        %v2145 = vsel %vm944, %v2143, %v2141
        %v2146 = vperm.slane %v2096, 5
        %v2147 = vperm.slane %v2097, 5
        %v2148 = vmul.f32 %v2144, %v2146
        %v2149 = vmul.f32 %v2145, %v2147
        %2150 = vrot.lane.b32.xlu0 %v2080, 113
        %v2151 = vpop.permute.xlu0 %2150
        %2152 = vrot.lane.b32.xlu0 %v2093, 113
        %v2153 = vpop.permute.xlu0 %2152
        %v2154 = vsel %vm955, %v2151, %v2153
        %v2155 = vsel %vm955, %v2153, %v2151
        %v2156 = vperm.slane %v2096, 6
        %v2157 = vperm.slane %v2097, 6
        %v2158 = vmul.f32 %v2154, %v2156
        %v2159 = vmul.f32 %v2155, %v2157
        %2160 = vrot.lane.b32.xlu0 %v2080, 112
        %v2161 = vpop.permute.xlu0 %2160
        %2162 = vrot.lane.b32.xlu0 %v2093, 112
        %v2163 = vpop.permute.xlu0 %2162
        %v2164 = vsel %vm966, %v2161, %v2163
        %v2165 = vsel %vm966, %v2163, %v2161
        %v2166 = vperm.slane %v2096, 7
        %v2167 = vperm.slane %v2097, 7
        %v2168 = vmul.f32 %v2164, %v2166
        %v2169 = vmul.f32 %v2165, %v2167
        %2170 = vrot.lane.b32.xlu0 %v2080, 111
        %v2171 = vpop.permute.xlu0 %2170
        %2172 = vrot.lane.b32.xlu0 %v2093, 111
        %v2173 = vpop.permute.xlu0 %2172
        %v2174 = vsel %vm977, %v2171, %v2173
        %v2175 = vsel %vm977, %v2173, %v2171
        %v2176 = vperm.slane %v2098, 0
        %v2177 = vperm.slane %v2099, 0
        %v2178 = vmul.f32 %v2174, %v2176
        %v2179 = vmul.f32 %v2175, %v2177
        %v2180 = vpack.c.bf16 %v2118, %v2108
        %v2181 = vpack.c.bf16 %v2119, %v2109
        %v2182 = vpack.c.bf16 %v2138, %v2128
        %v2183 = vpack.c.bf16 %v2139, %v2129
        %v2184 = vpack.c.bf16 %v2148, %v2080
        %v2185 = vpack.c.bf16 %v2149, %v2093
        %v2186 = vpack.c.bf16 %v2168, %v2158
        %v2187 = vpack.c.bf16 %v2169, %v2159
        %v2188 = vpack.c.bf16 %v2178, %v2178
        %v2189 = vpack.c.bf16 %v2179, %v2179
        %v2190 = vld [vmem:[%s25] sm:$0x3]
        %v2191 = vld [vmem:[%s26] sm:$0xf]
        %2193 = vset.pattern.permute.xlu0 0
        %2194 = vperm.xlu0 %2193, %v2191
        %v2195 = vpop.permute.xlu0 %2194
        %v2198 = vsel %vm1001, %v2190, 0
        %v2201 = vsel %vm1005, %v2188, 0
        %v2204 = vsel %vm1005, %v2189, 0
        %2206 = vmatpush.bf16.msra.mxu0 0
        %2207 = vmatpush.bf16.msra.mxu0 0
        %2208 = vmatpush.bf16.msra.mxu0 0
        %2209 = vmatpush.bf16.msra.mxu0 %v2201
        %2210 = vmatpush.bf16.msra.mxu0 %v2186
        %2211 = vmatpush.bf16.msra.mxu0 %v2184
        %2212 = vmatpush.bf16.msra.mxu0 %v2182
        %2213 = vmatpush.bf16.msra.mxu0 %v2180
        %2214 = vmatmul.bf16.gmra.mxu0 %v2198
        %v2215 = vpop.f32.mrf.mxu0
        %v2216 = vadd.f32 %v2195, %v2215
        %v2217 = vpop.f32.mrf.mxu0
        %2218 = vdwg.mxu0
        %2219 = vmatpush.bf16.msra.mxu0 0
        %2220 = vmatpush.bf16.msra.mxu0 0
        %2221 = vmatpush.bf16.msra.mxu0 0
        %2222 = vmatpush.bf16.msra.mxu0 %v2204
        %2223 = vmatpush.bf16.msra.mxu0 %v2187
        %2224 = vmatpush.bf16.msra.mxu0 %v2185
        %2225 = vmatpush.bf16.msra.mxu0 %v2183
        %2226 = vmatpush.bf16.msra.mxu0 %v2181
        %2227 = vmatmul.bf16.gmra.mxu0 %v2198
        %v2228 = vpop.f32.mrf.mxu0
        %v2229 = vadd.f32 %v2195, %v2228
        %v2230 = vpop.f32.mrf.mxu0
        %2231 = vdwg.mxu0
        %v2232 = vsel %vm1005, %v2216, -inf
        %v2233 = vrot.slane %v2232, 4
        %v2234 = vmax.f32 %v2232, %v2233
        %v2235 = vrot.slane %v2234, 2
        %v2236 = vmax.f32 %v2234, %v2235
        %v2237 = vrot.slane %v2236, 1
        %v2238 = vmax.f32 %v2236, %v2237
        %v2239 = vsel %vm1005, %v2229, -inf
        %v2240 = vrot.slane %v2239, 4
        %v2241 = vmax.f32 %v2239, %v2240
        %v2242 = vrot.slane %v2241, 2
        %v2243 = vmax.f32 %v2241, %v2242
        %v2244 = vrot.slane %v2243, 1
        %v2245 = vmax.f32 %v2243, %v2244
        %v2246 = vsub.f32 %v2216, %v2238
        %v2247 = vsub.f32 %v2229, %v2245
        %v2248 = vmul.f32 %v2246, 1.442695
        %v2249 = vpow.pop %v2248
        %v2250 = vmul.f32 %v2247, 1.442695
        %v2251 = vpow.pop %v2250
        %v2252 = vsel %vm1005, %v2249, 0.0
        %v2253 = vrot.slane %v2252, 4
        %v2254 = vadd.f32 %v2252, %v2253
        %v2255 = vrot.slane %v2254, 2
        %v2256 = vadd.f32 %v2254, %v2255
        %v2257 = vrot.slane %v2256, 1
        %v2258 = vadd.f32 %v2256, %v2257
        %v2259 = vsel %vm1005, %v2251, 0.0
        %v2260 = vrot.slane %v2259, 4
        %v2261 = vadd.f32 %v2259, %v2260
        %v2262 = vrot.slane %v2261, 2
        %v2263 = vadd.f32 %v2261, %v2262
        %v2264 = vrot.slane %v2263, 1
        %v2265 = vadd.f32 %v2263, %v2264
        %v2266 = vlog2.pop %v2258
        %v2267 = vmul.f32 %v2266, 0.6931472
        %v2268 = vlog2.pop %v2265
        %v2269 = vmul.f32 %v2268, 0.6931472
        %v2270 = vadd.f32 %v2238, %v2267
        %v2271 = vadd.f32 %v2245, %v2269
        %v2272 = vsub.f32 %v2216, %v2270
        %v2273 = vsub.f32 %v2229, %v2271
        %v2276 = vrot.slane %v2273, 4
        %v2277 = vsel %vm1005, %v2272, %v2276
        %2279 = vst [vmem:[%s879] sm:$0xff] %v2277
        %s2280 = smul.u32 2, %s43
        %p2281 = scmp.lt.s32.totalorder %s2280, 3
        %s2282 = scalar_select %p2281, %s2280, 3
        %s2283 = smul.addr %s2282, 4
        %s2284 = scalar_lea.vmem %s27, %s2283
        %s2285 = sand.u32 %s654, 1
        %s2286 = scalar_lea.sflag [#allocation3], %s2285
        %s2287 = sand.u32 %s654, 1
        %s2288 = scalar_lea.vmem [#allocation2], %s2287
        // Predicated region
        $region129: #{cnn_autoencoder_forward.1} parent=127 // pred_check
          %p2289 = pneg %p638
        $region130: #{cnn_autoencoder_forward.1} parent=127 // pred_check_branch
          %2291 = sbr.rel (%p2289) target = $region132
        $region131: #{cnn_autoencoder_forward.1} parent=127 // pred_region
          %s2292 = smul.u32 2, %s43
        $region132: #{cnn_autoencoder_forward.1} parent=127 // pred_fallthru
          _
        // Predicated region
        $region133: #{cnn_autoencoder_forward.1} parent=127 // pred_check
          %p2293 = pneg %p664
        $region134: #{cnn_autoencoder_forward.1} parent=127 // pred_check_branch
          %2295 = sbr.rel (%p2293) target = $region136
        $region135: #{cnn_autoencoder_forward.1} parent=127 // pred_region
          %2297 = vsyncadd %s2286, 0
          %s2298 = scalar_lea.hbm %s28, %s43
          %s2300 = sshll.u32 %s2288, 4
          %s2301 = int_to_ptr.vmem [resolvable:$true] %s2300
          %s2302 = sshll.u32 %s2298, 4
          %s2303 = int_to_ptr.hbm [resolvable:$true] %s2302
          %2305 = dma.vmem_to_hbm [thread:$0]  %s2301, 16, %s2303, %s2286
        $region136: #{cnn_autoencoder_forward.1} parent=127 // pred_fallthru
          _
      $region128: #{cnn_autoencoder_forward.1} parent=5 // pred_fallthru
        _
      %p2306 = scmp.le.s32.totalorder 2, %s38
      // Predicated region
      $region137: #{cnn_autoencoder_forward.1} parent=5 // pred_check
        %p2307 = pneg %p2306
      $region138: #{cnn_autoencoder_forward.1} parent=5 // pred_check_branch
        %2309 = sbr.rel (%p2307) target = $region140
      $region139: #{cnn_autoencoder_forward.1} parent=5 // pred_region
        %s2310 = ssub.s32 %s38, 2
        // Predicated region
        $region141: #{cnn_autoencoder_forward.1} parent=139 // pred_check
          %p2311 = pneg %p644
        $region142: #{cnn_autoencoder_forward.1} parent=139 // pred_check_branch
          %2313 = sbr.rel (%p2311) target = $region144
        $region143: #{cnn_autoencoder_forward.1} parent=139 // pred_region
          %s2314 = smul.u32 2, %s44
          %p2315 = scmp.lt.s32.totalorder %s2314, 3
          %s2316 = scalar_select %p2315, %s2314, 3
          %s2317 = smul.addr %s2316, 4
          %s2318 = scalar_lea.vmem %s27, %s2317
        $region144: #{cnn_autoencoder_forward.1} parent=139 // pred_fallthru
          _
        // Predicated region
        $region145: #{cnn_autoencoder_forward.1} parent=139 // pred_check
          %p2319 = pneg %p670
        $region146: #{cnn_autoencoder_forward.1} parent=139 // pred_check_branch
          %2321 = sbr.rel (%p2319) target = $region148
        $region147: #{cnn_autoencoder_forward.1} parent=139 // pred_region
          %s2322 = sand.u32 %s655, 1
          %s2323 = scalar_lea.sflag [#allocation3], %s2322
          %s2324 = sand.u32 %s655, 1
          %s2325 = scalar_lea.vmem [#allocation2], %s2324
          %2327 = dma.done %s2323, 16
        $region148: #{cnn_autoencoder_forward.1} parent=139 // pred_fallthru
          _
      $region140: #{cnn_autoencoder_forward.1} parent=5 // pred_fallthru
        _
    $region6: #{cnn_autoencoder_forward.1} parent=1 // loop_footer
      %s42 = sadd.s32 1, %s38
    $region7: #{cnn_autoencoder_forward.1} parent=1 // loop_footer_branch
      %37 = sbr.rel target = $region3
    $region8: #{cnn_autoencoder_forward.1} parent=1 // loop_exit
      _
    %2328 = vsyncpa [#allocation3], 1
    %s2329 = scalar_lea.sflag [#allocation3], 1
    %2330 = vsyncpa %s2329, 1

</llo_original>
